<compile_context>
chip_gen: v6e
topology: v6e:2x2x1
jax: 0.10.0
libtpu: 0.0.40
codegen_flags: <defaults>
</compile_context>

<pallas_src>
import math

import jax
import jax.numpy as jnp
from jax import lax
from jax.experimental import pallas as pl
from jax.experimental.pallas import tpu as pltpu

N_BITS = 8
N_LEVELS = float(2 ** N_BITS)  # 256 levels (UniformAffineQuantizer, n_bits=8)


# ----------------------------------------------------------------------------
# Quantization helpers (glue / reference)
# ----------------------------------------------------------------------------
def minmax_qparams(w):
    """Per-tensor min/max calibration (UniformAffineQuantizer init)."""
    w_max = jnp.maximum(jnp.max(w), 0.0)
    w_min = jnp.minimum(jnp.min(w), 0.0)
    delta = jnp.maximum((w_max - w_min) / (N_LEVELS - 1.0), 1e-8)
    zp = jnp.round(-w_min / delta)
    return delta, zp


def quantize_int(x, delta, zp):
    """Integer codes centered at zero: clip(round(x/delta)+zp) - zp  (|.|<=255)."""
    return jnp.clip(jnp.round(x / delta) + zp, 0.0, N_LEVELS - 1.0) - zp


def fake_quant(x, delta, zp):
    """UniformAffineQuantizer forward: round / clamp / dequant (f32 reference)."""
    return quantize_int(x, delta, zp) * delta


# ----------------------------------------------------------------------------
# Fused Pallas kernel: conv(+BN folded)+ReLU+act-quant  ->  Linear
# ----------------------------------------------------------------------------
def fused_quant_forward_kernel(xs_ref, w1_ref, wmask_ref, b1_ref, w2_ref,
                               b2_ref, qp_ref, o_ref):
    """Whole QuantModel forward on VMEM-resident tiles.

    xs_ref   : (N*H, W*K1p)    bf16  row-blocked im2col input (rows = h*N + n,
                                     K1p = 3*3*Cin padded 36->48)
    w1_ref   : (K1p, W*Cout)   bf16  compact conv weight (integer codes),
                                     lane-tiled W times (no structural zeros)
    wmask_ref: (W, W*Cout)     bf16  {0,1} block-diagonal mask over w
    b1_ref   : (1, W*Cout)     f32   folded conv bias, tiled over w
    w2_ref   : (Dout, F)       bf16  quantized Linear weight (integer codes),
                                     columns permuted to (h, w, c) order
    b2_ref   : (1, Dout)       f32   Linear bias
    qp_ref   : (2,)            f32   SMEM [conv_w_delta, lin_w_delta]
    o_ref    : (N, Dout)       f32   model output
    """
    n_b = o_ref.shape[0]                    # batch N
    n_h = xs_ref.shape[0] // n_b            # H
    width = wmask_ref.shape[0]              # W
    k1p, w_cout = w1_ref.shape              # padded K1, W*Cout

    w1_delta = qp_ref[0]
    w2_delta = qp_ref[1]

    # --- expand compact conv weight to block-diagonal over w (in VMEM only) --
    # (W, K1p, W*Cout) product; K1p is a multiple of the bf16 sublane tile, so
    # the leading-dim collapse reshape is layout-free.
    w1_bd = (w1_ref[...][None, :, :] * wmask_ref[...][:, None, :]
             ).reshape(width * k1p, w_cout)                 # (768, 256) codes

    # --- QuantModule #1: conv as one lane-dense matmul + folded bias + ReLU --
    conv = jnp.dot(xs_ref[...], w1_bd,
                   preferred_element_type=jnp.float32)      # (N*H, W*Cout) f32
    conv = conv * w1_delta + b1_ref[...]                    # dequant + bias
    conv = jnp.maximum(conv, 0.0)                           # fused nn.ReLU

    # --- per-tensor activation fake-quant (post-ReLU => min = 0, zp = 0) -----
    a_max = jnp.max(conv, keepdims=True)                    # (1, 1)
    a_delta = jnp.maximum(a_max * (1.0 / (N_LEVELS - 1.0)), 1e-8)
    inv_delta = pl.reciprocal(a_delta, approx=False)        # scalar, not a slab divide
    act = jnp.minimum(jnp.round(conv * inv_delta), N_LEVELS - 1.0)
    act_bf = act.astype(jnp.bfloat16)                       # int codes, exact in bf16

    # --- relayout to (N, H*W*Cout): lane-concat the per-h (N, W*Cout) chunks -
    # slab rows are h*N + n, so each chunk is a contiguous 2-row slice; the
    # concatenation offsets are multiples of 128 lanes (W*Cout = 256).
    act2 = jnp.concatenate(
        [act_bf[h * n_b:(h + 1) * n_b, :] for h in range(n_h)], axis=1)

    # --- QuantModule #2: Linear as ONE deep-K dot against (Dout, F) codes ----
    acc = lax.dot_general(act2, w2_ref[...],
                          dimension_numbers=(((1,), (1,)), ((), ())),
                          preferred_element_type=jnp.float32)   # (N, Dout)
    # last layer: no ReLU, no output act-quant (disable_network_output_quantization)
    o_ref[...] = acc * (a_delta * w2_delta) + b2_ref[...]


def quant_model_forward(xs, w1c, wmask, b1_row, w2t, b2_row, qp, n_batch, d_out):
    """Single fused pallas_call for the whole QuantModel forward."""
    return pl.pallas_call(
        fused_quant_forward_kernel,
        out_shape=jax.ShapeDtypeStruct((n_batch, d_out), jnp.float32),
        in_specs=[
            pl.BlockSpec(memory_space=pltpu.MemorySpace.VMEM),   # xs
            pl.BlockSpec(memory_space=pltpu.MemorySpace.VMEM),   # compact conv W
            pl.BlockSpec(memory_space=pltpu.MemorySpace.VMEM),   # block-diag mask
            pl.BlockSpec(memory_space=pltpu.MemorySpace.VMEM),   # bias1
            pl.BlockSpec(memory_space=pltpu.MemorySpace.VMEM),   # linear W (Dout, F)
            pl.BlockSpec(memory_space=pltpu.MemorySpace.VMEM),   # bias2
            pl.BlockSpec(memory_space=pltpu.MemorySpace.SMEM),   # [d_w1, d_w2]
        ],
        out_specs=pl.BlockSpec(memory_space=pltpu.MemorySpace.VMEM),
    )(xs, w1c, wmask, b1_row, w2t, b2_row, qp)


# ----------------------------------------------------------------------------
# One-time glue: im2col layout, BN fold, weight quantization & repacking
# ----------------------------------------------------------------------------
def build_conv_lhs(x_nchw, kh, kw, k1p):
    """Row-blocked im2col: (H*N, W*K1p), rows h*N+n, cols w*K1p+k (k padded)."""
    n, cin, h, w = x_nchw.shape
    k1 = kh * kw * cin
    x_nhwc = jnp.transpose(x_nchw, (0, 2, 3, 1))
    x_pad = jnp.pad(x_nhwc, ((0, 0), (1, 1), (1, 1), (0, 0)))
    cols = [x_pad[:, i:i + h, j:j + w, :] for i in range(kh) for j in range(kw)]
    patches = jnp.concatenate(cols, axis=-1)              # (N,H,W,K1), k=(i*kw+j)*cin+c
    patches = jnp.pad(patches, ((0, 0), (0, 0), (0, 0), (0, k1p - k1)))
    xs = jnp.transpose(patches, (1, 0, 2, 3)).reshape(h * n, w * k1p)
    return xs


def build_conv_rhs_compact(conv_w_fold, w_delta, w_zp, width, k1p):
    """Compact quantized conv weight, lane-tiled: (K1p, W*Cout), integer codes."""
    cout, cin, kh, kw = conv_w_fold.shape
    k1 = kh * kw * cin
    w_mat = jnp.transpose(conv_w_fold, (2, 3, 1, 0)).reshape(k1, cout)
    w_int = quantize_int(w_mat, w_delta, w_zp)             # exact small integers
    w_int = jnp.pad(w_int, ((0, k1p - k1), (0, 0)))        # (K1p, Cout)
    return jnp.tile(w_int, (1, width)).astype(jnp.bfloat16)  # (K1p, W*Cout)


def build_block_mask(width, cout):
    """(W, W*Cout) {0,1} mask: mask[w, w'*Cout + c] = (w == w')."""
    col = jnp.arange(width * cout)
    mask = (jnp.arange(width)[:, None] == (col[None, :] // cout))
    return mask.astype(jnp.bfloat16)


def build_linear_rhs_t(lin_w, w_delta, w_zp, cout, hh, ww):
    """Quantized Linear weight, natural (Dout, F) orientation, columns permuted
       from NCHW-flatten (c,h,w) to the kernel's (h,w,c) slab order."""
    dout = lin_w.shape[0]
    w_int = quantize_int(lin_w, w_delta, w_zp)             # (Dout, F) NCHW order
    w_int = w_int.reshape(dout, cout, hh, ww)              # (d, c, h, w)
    w_int = jnp.transpose(w_int, (0, 2, 3, 1))             # (d, h, w, c)
    return w_int.reshape(dout, hh * ww * cout).astype(jnp.bfloat16)   # (Dout, F)


# ----------------------------------------------------------------------------
# Pure-JAX f32 reference (same fake-quant semantics, NCHW flatten)
# ----------------------------------------------------------------------------
def reference_forward(x_nchw, conv_w_fold, conv_b_fold, lin_w, lin_b,
                      d1, z1, d2, z2):
    wq = fake_quant(conv_w_fold, d1, z1)
    conv = lax.conv_general_dilated(
        x_nchw, wq, window_strides=(1, 1), padding="SAME",
        dimension_numbers=("NCHW", "OIHW", "NCHW"))
    conv = conv + conv_b_fold[None, :, None, None]
    conv = jnp.maximum(conv, 0.0)
    a_max = jnp.max(conv)
    a_min = jnp.minimum(jnp.min(conv), 0.0)
    a_delta = jnp.maximum((a_max - a_min) / (N_LEVELS - 1.0), 1e-8)
    a_zp = jnp.round(-a_min / a_delta)
    act = fake_quant(conv, a_delta, a_zp)
    feat = act.reshape(act.shape[0], -1)                   # PyTorch NCHW flatten
    w2q = fake_quant(lin_w, d2, z2)
    return feat @ w2q.T + lin_b


if __name__ == "__main__":
    # ----- deterministic synthetic model parameters & input -----------------
    N, Cin, H, W = 2, 4, 16, 16
    Cout, KH, KW = 16, 3, 3
    F = Cout * H * W
    Dout = 32
    K1 = KH * KW * Cin              # 36
    K1P = 48                        # padded to a multiple of the bf16 sublane tile
                                    # (also makes total conv K = W*K1P = 768 = 6*128)

    key = jax.random.PRNGKey(0)
    ks = jax.random.split(key, 9)
    x_nchw = jax.random.normal(ks[0], (N, Cin, H, W), jnp.float32)

    conv_w = jax.random.normal(ks[1], (Cout, Cin, KH, KW), jnp.float32) * 0.1
    conv_b = jax.random.normal(ks[2], (Cout,), jnp.float32) * 0.1
    bn_gamma = 1.0 + 0.1 * jax.random.normal(ks[3], (Cout,), jnp.float32)
    bn_beta = 0.1 * jax.random.normal(ks[4], (Cout,), jnp.float32)
    bn_mean = 0.05 * jax.random.normal(ks[5], (Cout,), jnp.float32)
    bn_var = 1.0 + 0.1 * jnp.abs(jax.random.normal(ks[6], (Cout,), jnp.float32))
    lin_w = jax.random.normal(ks[7], (Dout, F), jnp.float32) / math.sqrt(F)
    lin_b = 0.1 * jax.random.normal(ks[8], (Dout,), jnp.float32)

    # ----- glue: BN folding (search_fold_and_remove_bn) ----------------------
    eps = 1e-5
    scale = bn_gamma / jnp.sqrt(bn_var + eps)
    conv_w_fold = conv_w * scale[:, None, None, None]
    conv_b_fold = (conv_b - bn_mean) * scale + bn_beta

    # ----- glue: per-tensor weight quant params (min/max calibration) --------
    d1, z1 = minmax_qparams(conv_w_fold)
    d2, z2 = minmax_qparams(lin_w)

    # ----- glue: build fused-kernel operands (one-time weight prep) ----------
    xs = build_conv_lhs(x_nchw, KH, KW, K1P).astype(jnp.bfloat16)  # (N*H, W*K1P)
    w1c = build_conv_rhs_compact(conv_w_fold, d1, z1, W, K1P)      # (K1P, W*Cout)
    wmask = build_block_mask(W, Cout)                              # (W, W*Cout)
    b1_row = jnp.tile(conv_b_fold, W).reshape(1, W * Cout).astype(jnp.float32)
    w2t = build_linear_rhs_t(lin_w, d2, z2, Cout, H, W)            # (Dout, F)
    b2_row = lin_b.reshape(1, Dout).astype(jnp.float32)
    qp = jnp.stack([d1, d2]).astype(jnp.float32)                   # SMEM scalars

    # ----- fused forward ------------------------------------------------------
    out = quant_model_forward(xs, w1c, wmask, b1_row, w2t, b2_row, qp, N, Dout)
    out = jax.block_until_ready(out)

    # ----- checks -------------------------------------------------------------
    ref = reference_forward(x_nchw, conv_w_fold, conv_b_fold, lin_w, lin_b,
                            d1, z1, d2, z2)
    assert out.shape == (N, Dout)
    assert bool(jnp.all(jnp.isfinite(out)))
    assert bool(jnp.allclose(out, ref, rtol=1e-1, atol=1e-1)), (
        float(jnp.max(jnp.abs(out - ref))))
    print("KERNEL_OK")
</pallas_src>

<mosaic_0001>
module attributes {stable_mosaic.version = 11 : i64} {
  func.func @fused_quant_forward_kernel(%arg0: memref<32x768xbf16, #tpu.memory_space<vmem>>, %arg1: memref<48x256xbf16, #tpu.memory_space<vmem>>, %arg2: memref<16x256xbf16, #tpu.memory_space<vmem>>, %arg3: memref<1x256xf32, #tpu.memory_space<vmem>>, %arg4: memref<32x4096xbf16, #tpu.memory_space<vmem>>, %arg5: memref<1x32xf32, #tpu.memory_space<vmem>>, %arg6: memref<2xf32, #tpu.memory_space<smem>>, %arg7: memref<2x32xf32, #tpu.memory_space<vmem>>) attributes {dimension_semantics = [], scalar_prefetch = 0 : i64, scratch_operands = 0 : i64, tpu.core_type = #tpu.core_type<tc>} {
    %c0 = arith.constant 0 : index
    %0 = memref.load %arg6[%c0] : memref<2xf32, #tpu.memory_space<smem>>
    %c1 = arith.constant 1 : index
    %1 = memref.load %arg6[%c1] : memref<2xf32, #tpu.memory_space<smem>>
    %c0_0 = arith.constant 0 : index
    %c0_1 = arith.constant 0 : index
    %2 = vector.load %arg1[%c0_0, %c0_1] : memref<48x256xbf16, #tpu.memory_space<vmem>>, vector<48x256xbf16>
    %3 = vector.shape_cast %2 : vector<48x256xbf16> to vector<1x48x256xbf16>
    %c0_2 = arith.constant 0 : index
    %c0_3 = arith.constant 0 : index
    %4 = vector.load %arg2[%c0_2, %c0_3] : memref<16x256xbf16, #tpu.memory_space<vmem>>, vector<16x256xbf16>
    %5 = vector.shape_cast %4 : vector<16x256xbf16> to vector<16x1x256xbf16>
    %6 = vector.broadcast %3 : vector<1x48x256xbf16> to vector<16x48x256xbf16>
    %7 = vector.broadcast %5 : vector<16x1x256xbf16> to vector<16x48x256xbf16>
    %8 = arith.mulf %6, %7 : vector<16x48x256xbf16>
    %9 = vector.shape_cast %8 : vector<16x48x256xbf16> to vector<768x256xbf16>
    %c0_4 = arith.constant 0 : index
    %c0_5 = arith.constant 0 : index
    %10 = vector.load %arg0[%c0_4, %c0_5] : memref<32x768xbf16, #tpu.memory_space<vmem>>, vector<32x768xbf16>
    %cst = arith.constant dense<0.000000e+00> : vector<32x256xf32>
    %11 = tpu.matmul %10, %9, %cst {dimension_numbers = #tpu.dot_dimension_numbers<[1], [0], [0], [1], [0, 0, 1, 1], [], []>} : vector<32x768xbf16>, vector<768x256xbf16>, vector<32x256xf32> -> vector<32x256xf32>
    %12 = vector.broadcast %0 : f32 to vector<32x256xf32>
    %13 = arith.mulf %11, %12 : vector<32x256xf32>
    %c0_6 = arith.constant 0 : index
    %c0_7 = arith.constant 0 : index
    %14 = vector.load %arg3[%c0_6, %c0_7] : memref<1x256xf32, #tpu.memory_space<vmem>>, vector<1x256xf32>
    %15 = vector.broadcast %14 : vector<1x256xf32> to vector<32x256xf32>
    %16 = arith.addf %13, %15 : vector<32x256xf32>
    %cst_8 = arith.constant 0.000000e+00 : f32
    %17 = vector.broadcast %cst_8 : f32 to vector<32x256xf32>
    %18 = arith.maximumf %16, %17 : vector<32x256xf32>
    %19 = vector.shape_cast %18 : vector<32x256xf32> to vector<1x32x256xf32>
    %cst_9 = arith.constant dense<0xFF800000> : vector<1xf32>
    %20 = vector.multi_reduction <maximumf>, %19, %cst_9 [1, 2] : vector<1x32x256xf32> to vector<1xf32>
    %21 = vector.shape_cast %20 : vector<1xf32> to vector<1x1x1xf32>
    %22 = vector.extract %21[0, 0, 0] : f32 from vector<1x1x1xf32>
    %23 = vector.broadcast %22 : f32 to vector<1x1xf32>
    %cst_10 = arith.constant 0.00392156886 : f32
    %24 = vector.broadcast %cst_10 : f32 to vector<1x1xf32>
    %25 = arith.mulf %23, %24 : vector<1x1xf32>
    %cst_11 = arith.constant 9.99999993E-9 : f32
    %26 = vector.broadcast %cst_11 : f32 to vector<1x1xf32>
    %27 = arith.maximumf %25, %26 : vector<1x1xf32>
    %28 = tpu.reciprocal %27 : vector<1x1xf32> -> vector<1x1xf32>
    %29 = vector.broadcast %28 : vector<1x1xf32> to vector<32x256xf32>
    %30 = arith.mulf %18, %29 : vector<32x256xf32>
    %31 = math.roundeven %30 : vector<32x256xf32>
    %cst_12 = arith.constant 2.550000e+02 : f32
    %32 = vector.broadcast %cst_12 : f32 to vector<32x256xf32>
    %33 = arith.minimumf %31, %32 : vector<32x256xf32>
    %34 = arith.truncf %33 : vector<32x256xf32> to vector<32x256xbf16>
    %35 = vector.extract_strided_slice %34 {offsets = [0, 0], sizes = [2, 256], strides = [1, 1]} : vector<32x256xbf16> to vector<2x256xbf16>
    %36 = vector.extract_strided_slice %34 {offsets = [2, 0], sizes = [2, 256], strides = [1, 1]} : vector<32x256xbf16> to vector<2x256xbf16>
    %37 = vector.extract_strided_slice %34 {offsets = [4, 0], sizes = [2, 256], strides = [1, 1]} : vector<32x256xbf16> to vector<2x256xbf16>
    %38 = vector.extract_strided_slice %34 {offsets = [6, 0], sizes = [2, 256], strides = [1, 1]} : vector<32x256xbf16> to vector<2x256xbf16>
    %39 = vector.extract_strided_slice %34 {offsets = [8, 0], sizes = [2, 256], strides = [1, 1]} : vector<32x256xbf16> to vector<2x256xbf16>
    %40 = vector.extract_strided_slice %34 {offsets = [10, 0], sizes = [2, 256], strides = [1, 1]} : vector<32x256xbf16> to vector<2x256xbf16>
    %41 = vector.extract_strided_slice %34 {offsets = [12, 0], sizes = [2, 256], strides = [1, 1]} : vector<32x256xbf16> to vector<2x256xbf16>
    %42 = vector.extract_strided_slice %34 {offsets = [14, 0], sizes = [2, 256], strides = [1, 1]} : vector<32x256xbf16> to vector<2x256xbf16>
    %43 = vector.extract_strided_slice %34 {offsets = [16, 0], sizes = [2, 256], strides = [1, 1]} : vector<32x256xbf16> to vector<2x256xbf16>
    %44 = vector.extract_strided_slice %34 {offsets = [18, 0], sizes = [2, 256], strides = [1, 1]} : vector<32x256xbf16> to vector<2x256xbf16>
    %45 = vector.extract_strided_slice %34 {offsets = [20, 0], sizes = [2, 256], strides = [1, 1]} : vector<32x256xbf16> to vector<2x256xbf16>
    %46 = vector.extract_strided_slice %34 {offsets = [22, 0], sizes = [2, 256], strides = [1, 1]} : vector<32x256xbf16> to vector<2x256xbf16>
    %47 = vector.extract_strided_slice %34 {offsets = [24, 0], sizes = [2, 256], strides = [1, 1]} : vector<32x256xbf16> to vector<2x256xbf16>
    %48 = vector.extract_strided_slice %34 {offsets = [26, 0], sizes = [2, 256], strides = [1, 1]} : vector<32x256xbf16> to vector<2x256xbf16>
    %49 = vector.extract_strided_slice %34 {offsets = [28, 0], sizes = [2, 256], strides = [1, 1]} : vector<32x256xbf16> to vector<2x256xbf16>
    %50 = vector.extract_strided_slice %34 {offsets = [30, 0], sizes = [2, 256], strides = [1, 1]} : vector<32x256xbf16> to vector<2x256xbf16>
    %51 = tpu.concatenate %35, %36, %37, %38, %39, %40, %41, %42, %43, %44, %45, %46, %47, %48, %49, %50 in 1 : vector<2x256xbf16>, vector<2x256xbf16>, vector<2x256xbf16>, vector<2x256xbf16>, vector<2x256xbf16>, vector<2x256xbf16>, vector<2x256xbf16>, vector<2x256xbf16>, vector<2x256xbf16>, vector<2x256xbf16>, vector<2x256xbf16>, vector<2x256xbf16>, vector<2x256xbf16>, vector<2x256xbf16>, vector<2x256xbf16>, vector<2x256xbf16> -> vector<2x4096xbf16>
    %c0_13 = arith.constant 0 : index
    %c0_14 = arith.constant 0 : index
    %52 = vector.load %arg4[%c0_13, %c0_14] : memref<32x4096xbf16, #tpu.memory_space<vmem>>, vector<32x4096xbf16>
    %cst_15 = arith.constant dense<0.000000e+00> : vector<2x32xf32>
    %53 = tpu.matmul %51, %52, %cst_15 {dimension_numbers = #tpu.dot_dimension_numbers<[1], [1], [0], [0], [0, 0, 1, 0], [], []>} : vector<2x4096xbf16>, vector<32x4096xbf16>, vector<2x32xf32> -> vector<2x32xf32>
    %54 = vector.broadcast %1 : f32 to vector<1x1xf32>
    %55 = arith.mulf %27, %54 : vector<1x1xf32>
    %56 = vector.broadcast %55 : vector<1x1xf32> to vector<2x32xf32>
    %57 = arith.mulf %53, %56 : vector<2x32xf32>
    %c0_16 = arith.constant 0 : index
    %c0_17 = arith.constant 0 : index
    %58 = vector.load %arg5[%c0_16, %c0_17] : memref<1x32xf32, #tpu.memory_space<vmem>>, vector<1x32xf32>
    %59 = vector.broadcast %58 : vector<1x32xf32> to vector<2x32xf32>
    %60 = arith.addf %57, %59 : vector<2x32xf32>
    %c0_18 = arith.constant 0 : index
    %c0_19 = arith.constant 0 : index
    %61 = vector.load %arg7[%c0_18, %c0_19] : memref<2x32xf32, #tpu.memory_space<vmem>>, vector<2x32xf32>
    tpu.vector_store %arg7[%c0_18, %c0_19], %60 {strides = array<i32>} : memref<2x32xf32, #tpu.memory_space<vmem>>, vector<2x32xf32>,
    return
  }
}

</mosaic_0001>

<llo_original>
// kernel: tpu_custom_call.1
$region0: #{tpu_custom_call.1}
  #allocation0 [shape = 'u32[]', space=smem, size = 0x4, offset = 0x4, fixed_abs, tag = 'smem constant byte address 0x4 - core index']
  #allocation1 [shape = 'u32[144,128]{1,0:T(1,128)}', space=vmem, size = 0x12000, scoped, tag = 'internal scratch']
  %s0 = inlined_call_operand.hbm [shape: bf16[32,768], index: 0, kind: input, shape index: {}]
  %s1 = inlined_call_operand.hbm [shape: bf16[48,256], index: 1, kind: input, shape index: {}]
  %s2 = inlined_call_operand.hbm [shape: bf16[16,256], index: 2, kind: input, shape index: {}]
  %s3 = inlined_call_operand.vmem [shape: f32[1,256], index: 3, kind: input, shape index: {}]
  %s4 = inlined_call_operand.hbm [shape: bf16[32,4096], index: 4, kind: input, shape index: {}]
  %s5 = inlined_call_operand.vmem [shape: f32[1,32], index: 5, kind: input, shape index: {}]
  %s6 = inlined_call_operand.vmem [shape: f32[2], index: 6, kind: input, shape index: {}]
  %s7 = inlined_call_operand.hbm [shape: f32[2,32], index: 7, kind: output, shape index: {}]
  %s8 = sld [smem:[#allocation0]]
  $region58: #{tpu_custom_call.1} parent=0
    _
  %s10 = ssub.s32 1, %s8
  %s11 = scalar_select 0, %s10, %s8
  $region1: #{tpu_custom_call.1} parent=0
    #allocation2 [shape = 'u8[49152]{0}', space=vmem, size = 0xc000, scoped, tag = 'input window, operand 0, single buffered']
    #allocation3 [shape = 's32[1]{0}', space=sflag, size = 0x4, scoped, tag = 'scoped memory for tpu_custom_call.1']
    #allocation4 [shape = 's32[1]{0}', space=sflag, size = 0x4, scoped, tag = 'scoped memory for tpu_custom_call.1']
    #allocation5 [shape = 's32[1]{0}', space=sflag, size = 0x4, scoped, tag = 'scoped memory for tpu_custom_call.1']
    #allocation6 [shape = 'u8[24576]{0}', space=vmem, size = 0x6000, scoped, tag = 'input window, operand 1, single buffered']
    #allocation7 [shape = 's32[1]{0}', space=sflag, size = 0x4, scoped, tag = 'scoped memory for tpu_custom_call.1']
    #allocation8 [shape = 'u8[8192]{0}', space=vmem, size = 0x2000, scoped, tag = 'input window, operand 2, single buffered']
    #allocation9 [shape = 'u8[262144]{0}', space=vmem, size = 0x40000, scoped, tag = 'input window, operand 4, single buffered']
    #allocation10 [shape = 's32[1]{0}', space=sflag, size = 0x4, scoped, tag = 'scoped memory for tpu_custom_call.1']
    #allocation11 [shape = 'u8[512]{0}', space=smem, size = 0x200, scoped, tag = 'input window, operand 6, single buffered']
    #allocation12 [shape = 'u8[1024]{0}', space=vmem, size = 0x400, scoped, tag = 'output window, operand 0, single buffered']
    %12 = vsyncpa [#allocation3], 0
    %13 = vsyncpa [#allocation7], 0
    %14 = vsyncpa [#allocation10], 0
    %15 = vsyncpa [#allocation5], 0
    %16 = vsyncpa [#allocation4], 0
    // Predicated region
    $region2: #{tpu_custom_call.1} parent=1 // pred_check
      _
    $region3: #{tpu_custom_call.1} parent=1 // pred_check_branch
      %18 = sbr.rel (0) target = $region5
    $region4: #{tpu_custom_call.1} parent=1 // pred_region
      %s20 = ssub.s32 1536, 1536
      %21 = vsyncadd [#allocation3], %s20
      %s22 = sshll.u32 [#allocation2], 4
      %s23 = int_to_ptr.vmem [resolvable:$true] %s22
      %28 = dma.hbm_to_vmem [thread:$0]  %s0, 1536, %s23, [#allocation3], 384, 384, 24
    $region5: #{tpu_custom_call.1} parent=1 // pred_fallthru
      _
    // Predicated region
    $region6: #{tpu_custom_call.1} parent=1 // pred_check
      _
    $region7: #{tpu_custom_call.1} parent=1 // pred_check_branch
      %30 = sbr.rel (0) target = $region9
    $region8: #{tpu_custom_call.1} parent=1 // pred_region
      %s32 = ssub.s32 768, 768
      %33 = vsyncadd [#allocation7], %s32
      %s34 = sshll.u32 [#allocation6], 4
      %s35 = int_to_ptr.vmem [resolvable:$true] %s34
      %40 = dma.hbm_to_vmem [thread:$0]  %s1, 768, %s35, [#allocation7], 128, 128, 8
    $region9: #{tpu_custom_call.1} parent=1 // pred_fallthru
      _
    // Predicated region
    $region10: #{tpu_custom_call.1} parent=1 // pred_check
      _
    $region11: #{tpu_custom_call.1} parent=1 // pred_check_branch
      %42 = sbr.rel (0) target = $region13
    $region12: #{tpu_custom_call.1} parent=1 // pred_region
      %s44 = ssub.s32 256, 256
      %45 = vsyncadd [#allocation7], %s44
      %s46 = sshll.u32 [#allocation8], 4
      %s47 = int_to_ptr.vmem [resolvable:$true] %s46
      %52 = dma.hbm_to_vmem [thread:$0]  %s2, 256, %s47, [#allocation7], 128, 128, 8
    $region13: #{tpu_custom_call.1} parent=1 // pred_fallthru
      _
    // Predicated region
    $region14: #{tpu_custom_call.1} parent=1 // pred_check
      _
    $region15: #{tpu_custom_call.1} parent=1 // pred_check_branch
      %54 = sbr.rel (0) target = $region17
    $region16: #{tpu_custom_call.1} parent=1 // pred_region
      _
    $region17: #{tpu_custom_call.1} parent=1 // pred_fallthru
      _
    // Predicated region
    $region18: #{tpu_custom_call.1} parent=1 // pred_check
      _
    $region19: #{tpu_custom_call.1} parent=1 // pred_check_branch
      %56 = sbr.rel (0) target = $region21
    $region20: #{tpu_custom_call.1} parent=1 // pred_region
      %s58 = ssub.s32 8192, 8192
      %59 = vsyncadd [#allocation10], %s58
      %s60 = sshll.u32 [#allocation9], 4
      %s61 = int_to_ptr.vmem [resolvable:$true] %s60
      %66 = dma.hbm_to_vmem [thread:$0]  %s4, 8192, %s61, [#allocation10], 2048, 2048, 128
    $region21: #{tpu_custom_call.1} parent=1 // pred_fallthru
      _
    // Predicated region
    $region22: #{tpu_custom_call.1} parent=1 // pred_check
      _
    $region23: #{tpu_custom_call.1} parent=1 // pred_check_branch
      %68 = sbr.rel (0) target = $region25
    $region24: #{tpu_custom_call.1} parent=1 // pred_region
      _
    $region25: #{tpu_custom_call.1} parent=1 // pred_fallthru
      _
    // Predicated region
    $region26: #{tpu_custom_call.1} parent=1 // pred_check
      _
    $region27: #{tpu_custom_call.1} parent=1 // pred_check_branch
      %70 = sbr.rel (0) target = $region29
    $region28: #{tpu_custom_call.1} parent=1 // pred_region
      %s72 = ssub.s32 16, 16
      %73 = vsyncadd [#allocation5], %s72
      %s75 = sshll.u32 %s6, 4
      %s76 = int_to_ptr.vmem [resolvable:$true] %s75
      %78 = dma.vmem_to_smem %s76, 16, [#allocation11], [#allocation5]
    $region29: #{tpu_custom_call.1} parent=1 // pred_fallthru
      _
    // Predicated region
    $region30: #{tpu_custom_call.1} parent=1 // pred_check
      _
    $region31: #{tpu_custom_call.1} parent=1 // pred_check_branch
      %80 = sbr.rel (0) target = $region33
    $region32: #{tpu_custom_call.1} parent=1 // pred_region
      %81 = dma.done [#allocation3], 1536
    $region33: #{tpu_custom_call.1} parent=1 // pred_fallthru
      _
    // Predicated region
    $region34: #{tpu_custom_call.1} parent=1 // pred_check
      _
    $region35: #{tpu_custom_call.1} parent=1 // pred_check_branch
      %83 = sbr.rel (0) target = $region37
    $region36: #{tpu_custom_call.1} parent=1 // pred_region
      %84 = dma.done [#allocation7], 768
    $region37: #{tpu_custom_call.1} parent=1 // pred_fallthru
      _
    // Predicated region
    $region38: #{tpu_custom_call.1} parent=1 // pred_check
      _
    $region39: #{tpu_custom_call.1} parent=1 // pred_check_branch
      %86 = sbr.rel (0) target = $region41
    $region40: #{tpu_custom_call.1} parent=1 // pred_region
      %87 = dma.done [#allocation7], 256
    $region41: #{tpu_custom_call.1} parent=1 // pred_fallthru
      _
    // Predicated region
    $region42: #{tpu_custom_call.1} parent=1 // pred_check
      _
    $region43: #{tpu_custom_call.1} parent=1 // pred_check_branch
      %89 = sbr.rel (0) target = $region45
    $region44: #{tpu_custom_call.1} parent=1 // pred_region
      %90 = dma.done [#allocation10], 8192
    $region45: #{tpu_custom_call.1} parent=1 // pred_fallthru
      _
    // Predicated region
    $region46: #{tpu_custom_call.1} parent=1 // pred_check
      _
    $region47: #{tpu_custom_call.1} parent=1 // pred_check_branch
      %92 = sbr.rel (0) target = $region49
    $region48: #{tpu_custom_call.1} parent=1 // pred_region
      %93 = dma.done [#allocation5], 16
    $region49: #{tpu_custom_call.1} parent=1 // pred_fallthru
      _
    %94 = sfence
    %s96 = sld [smem:[#allocation11]]
    %s97 = sld [smem:[#allocation11 + $0x1]]
    %v98 = vld [vmem:[#allocation6] sm:$0xff]
    %v99 = vld [vmem:[#allocation6 + $0x8] sm:$0xff]
    %v100 = vld [vmem:[#allocation6 + $0x10] sm:$0xff]
    %v101 = vld [vmem:[#allocation6 + $0x18] sm:$0xff]
    %v102 = vld [vmem:[#allocation6 + $0x20] sm:$0xff]
    %v103 = vld [vmem:[#allocation6 + $0x28] sm:$0xff]
    %v104 = vld [vmem:[#allocation8] sm:$0xff]
    %v105 = vld [vmem:[#allocation8 + $0x8] sm:$0xff]
    %v109 = vunpack.c.l.s4 1966171168
    %v110 = vunpack.c.0.s8 %v109
    %v111 = vlaneseq
    %v112 = vshrl.u32 %v111, 7
    %v113 = vsub.s32 %v110, %v112
    %v114 = vrot.slane %v104, %v113
    %v115 = vcombine.high %v114, %v114
    %v117 = vunpack.c.l.s4 1966171168
    %v118 = vunpack.c.0.s8 %v117
    %v119 = vlaneseq
    %v120 = vshrl.u32 %v119, 7
    %v121 = vsub.s32 %v118, %v120
    %v122 = vrot.slane %v114, %v121
    %v124 = vunpack.c.l.s4 1966171168
    %v125 = vunpack.c.0.s8 %v124
    %v126 = vlaneseq
    %v127 = vshrl.u32 %v126, 7
    %v128 = vsub.s32 %v125, %v127
    %v129 = vrot.slane %v115, %v128
    %v130 = vcombine.high %v122, %v122
    %v131 = vcombine.high %v129, %v129
    %v133 = vunpack.c.l.s4 1966171168
    %v134 = vunpack.c.0.s8 %v133
    %v135 = vlaneseq
    %v136 = vshrl.u32 %v135, 7
    %v137 = vsub.s32 %v134, %v136
    %v138 = vrot.slane %v105, %v137
    %v139 = vcombine.high %v138, %v138
    %v141 = vunpack.c.l.s4 1966171168
    %v142 = vunpack.c.0.s8 %v141
    %v143 = vlaneseq
    %v144 = vshrl.u32 %v143, 7
    %v145 = vsub.s32 %v142, %v144
    %v146 = vrot.slane %v138, %v145
    %v148 = vunpack.c.l.s4 1966171168
    %v149 = vunpack.c.0.s8 %v148
    %v150 = vlaneseq
    %v151 = vshrl.u32 %v150, 7
    %v152 = vsub.s32 %v149, %v151
    %v153 = vrot.slane %v139, %v152
    %v154 = vcombine.high %v146, %v146
    %v155 = vcombine.high %v153, %v153
    %v156 = vunpack.i.l.s16 %v122
    %v157 = vunpack.i.h.s16 %v122
    %v158 = vunpack.i.l.s16 %v129
    %v159 = vunpack.i.h.s16 %v129
    %v160 = vunpack.i.l.s16 %v130
    %v161 = vunpack.i.h.s16 %v130
    %v162 = vunpack.i.l.s16 %v131
    %v163 = vunpack.i.h.s16 %v131
    %v164 = vunpack.i.l.s16 %v146
    %v165 = vunpack.i.h.s16 %v146
    %v166 = vunpack.i.l.s16 %v153
    %v167 = vunpack.i.h.s16 %v153
    %v168 = vunpack.i.l.s16 %v154
    %v169 = vunpack.i.h.s16 %v154
    %v170 = vunpack.i.l.s16 %v155
    %v171 = vunpack.i.h.s16 %v155
    %v172 = vpack.i.b16 %v156, %v156
    %v173 = vpack.i.b16 %v157, %v157
    %v174 = vpack.i.b16 %v158, %v158
    %v175 = vpack.i.b16 %v159, %v159
    %v176 = vpack.i.b16 %v160, %v160
    %v177 = vpack.i.b16 %v161, %v161
    %v178 = vpack.i.b16 %v162, %v162
    %v179 = vpack.i.b16 %v163, %v163
    %v180 = vpack.i.b16 %v164, %v164
    %v181 = vpack.i.b16 %v165, %v165
    %v182 = vpack.i.b16 %v166, %v166
    %v183 = vpack.i.b16 %v167, %v167
    %v184 = vpack.i.b16 %v168, %v168
    %v185 = vpack.i.b16 %v169, %v169
    %v186 = vpack.i.b16 %v170, %v170
    %v187 = vpack.i.b16 %v171, %v171
    %v188 = vlaneseq
    %v189 = vshrl.u32 %v188, 7
    %v190 = vsub.s32 0, %v189
    %v191 = vrot.slane %v172, %v190
    %v192 = vlaneseq
    %v193 = vshrl.u32 %v192, 7
    %v194 = vsub.s32 1, %v193
    %v195 = vrot.slane %v172, %v194
    %v196 = vlaneseq
    %v197 = vshrl.u32 %v196, 7
    %v198 = vsub.s32 0, %v197
    %v199 = vrot.slane %v173, %v198
    %v200 = vlaneseq
    %v201 = vshrl.u32 %v200, 7
    %v202 = vsub.s32 1, %v201
    %v203 = vrot.slane %v173, %v202
    %v204 = vlaneseq
    %v205 = vshrl.u32 %v204, 7
    %v206 = vsub.s32 0, %v205
    %v207 = vrot.slane %v174, %v206
    %v208 = vlaneseq
    %v209 = vshrl.u32 %v208, 7
    %v210 = vsub.s32 1, %v209
    %v211 = vrot.slane %v174, %v210
    %v212 = vlaneseq
    %v213 = vshrl.u32 %v212, 7
    %v214 = vsub.s32 0, %v213
    %v215 = vrot.slane %v175, %v214
    %v216 = vlaneseq
    %v217 = vshrl.u32 %v216, 7
    %v218 = vsub.s32 1, %v217
    %v219 = vrot.slane %v175, %v218
    %v220 = vlaneseq
    %v221 = vshrl.u32 %v220, 7
    %v222 = vsub.s32 0, %v221
    %v223 = vrot.slane %v176, %v222
    %v224 = vlaneseq
    %v225 = vshrl.u32 %v224, 7
    %v226 = vsub.s32 1, %v225
    %v227 = vrot.slane %v176, %v226
    %v228 = vlaneseq
    %v229 = vshrl.u32 %v228, 7
    %v230 = vsub.s32 0, %v229
    %v231 = vrot.slane %v177, %v230
    %v232 = vlaneseq
    %v233 = vshrl.u32 %v232, 7
    %v234 = vsub.s32 1, %v233
    %v235 = vrot.slane %v177, %v234
    %v236 = vlaneseq
    %v237 = vshrl.u32 %v236, 7
    %v238 = vsub.s32 0, %v237
    %v239 = vrot.slane %v178, %v238
    %v240 = vlaneseq
    %v241 = vshrl.u32 %v240, 7
    %v242 = vsub.s32 1, %v241
    %v243 = vrot.slane %v178, %v242
    %v244 = vlaneseq
    %v245 = vshrl.u32 %v244, 7
    %v246 = vsub.s32 0, %v245
    %v247 = vrot.slane %v179, %v246
    %v248 = vlaneseq
    %v249 = vshrl.u32 %v248, 7
    %v250 = vsub.s32 1, %v249
    %v251 = vrot.slane %v179, %v250
    %v252 = vlaneseq
    %v253 = vshrl.u32 %v252, 7
    %v254 = vsub.s32 0, %v253
    %v255 = vrot.slane %v180, %v254
    %v256 = vlaneseq
    %v257 = vshrl.u32 %v256, 7
    %v258 = vsub.s32 1, %v257
    %v259 = vrot.slane %v180, %v258
    %v260 = vlaneseq
    %v261 = vshrl.u32 %v260, 7
    %v262 = vsub.s32 0, %v261
    %v263 = vrot.slane %v181, %v262
    %v264 = vlaneseq
    %v265 = vshrl.u32 %v264, 7
    %v266 = vsub.s32 1, %v265
    %v267 = vrot.slane %v181, %v266
    %v268 = vlaneseq
    %v269 = vshrl.u32 %v268, 7
    %v270 = vsub.s32 0, %v269
    %v271 = vrot.slane %v182, %v270
    %v272 = vlaneseq
    %v273 = vshrl.u32 %v272, 7
    %v274 = vsub.s32 1, %v273
    %v275 = vrot.slane %v182, %v274
    %v276 = vlaneseq
    %v277 = vshrl.u32 %v276, 7
    %v278 = vsub.s32 0, %v277
    %v279 = vrot.slane %v183, %v278
    %v280 = vlaneseq
    %v281 = vshrl.u32 %v280, 7
    %v282 = vsub.s32 1, %v281
    %v283 = vrot.slane %v183, %v282
    %v284 = vlaneseq
    %v285 = vshrl.u32 %v284, 7
    %v286 = vsub.s32 0, %v285
    %v287 = vrot.slane %v184, %v286
    %v288 = vlaneseq
    %v289 = vshrl.u32 %v288, 7
    %v290 = vsub.s32 1, %v289
    %v291 = vrot.slane %v184, %v290
    %v292 = vlaneseq
    %v293 = vshrl.u32 %v292, 7
    %v294 = vsub.s32 0, %v293
    %v295 = vrot.slane %v185, %v294
    %v296 = vlaneseq
    %v297 = vshrl.u32 %v296, 7
    %v298 = vsub.s32 1, %v297
    %v299 = vrot.slane %v185, %v298
    %v300 = vlaneseq
    %v301 = vshrl.u32 %v300, 7
    %v302 = vsub.s32 0, %v301
    %v303 = vrot.slane %v186, %v302
    %v304 = vlaneseq
    %v305 = vshrl.u32 %v304, 7
    %v306 = vsub.s32 1, %v305
    %v307 = vrot.slane %v186, %v306
    %v308 = vlaneseq
    %v309 = vshrl.u32 %v308, 7
    %v310 = vsub.s32 0, %v309
    %v311 = vrot.slane %v187, %v310
    %v312 = vlaneseq
    %v313 = vshrl.u32 %v312, 7
    %v314 = vsub.s32 1, %v313
    %v315 = vrot.slane %v187, %v314
    %v317 = vpack.i.b16 %v191, %v191
    %v319 = vlaneseq
    %v320 = vshrl.u32 %v319, 7
    %v321 = vsub.s32 0, %v320
    %v322 = vrot.slane %v317, %v321
    %v324 = vpack.i.b16 %v195, %v195
    %v326 = vlaneseq
    %v327 = vshrl.u32 %v326, 7
    %v328 = vsub.s32 0, %v327
    %v329 = vrot.slane %v324, %v328
    %v331 = vpack.i.b16 %v199, %v199
    %v333 = vlaneseq
    %v334 = vshrl.u32 %v333, 7
    %v335 = vsub.s32 0, %v334
    %v336 = vrot.slane %v331, %v335
    %v338 = vpack.i.b16 %v203, %v203
    %v340 = vlaneseq
    %v341 = vshrl.u32 %v340, 7
    %v342 = vsub.s32 0, %v341
    %v343 = vrot.slane %v338, %v342
    %v345 = vpack.i.b16 %v207, %v207
    %v347 = vlaneseq
    %v348 = vshrl.u32 %v347, 7
    %v349 = vsub.s32 0, %v348
    %v350 = vrot.slane %v345, %v349
    %v352 = vpack.i.b16 %v211, %v211
    %v354 = vlaneseq
    %v355 = vshrl.u32 %v354, 7
    %v356 = vsub.s32 0, %v355
    %v357 = vrot.slane %v352, %v356
    %v359 = vpack.i.b16 %v215, %v215
    %v361 = vlaneseq
    %v362 = vshrl.u32 %v361, 7
    %v363 = vsub.s32 0, %v362
    %v364 = vrot.slane %v359, %v363
    %v366 = vpack.i.b16 %v219, %v219
    %v368 = vlaneseq
    %v369 = vshrl.u32 %v368, 7
    %v370 = vsub.s32 0, %v369
    %v371 = vrot.slane %v366, %v370
    %v373 = vpack.i.b16 %v223, %v223
    %v375 = vlaneseq
    %v376 = vshrl.u32 %v375, 7
    %v377 = vsub.s32 0, %v376
    %v378 = vrot.slane %v373, %v377
    %v380 = vpack.i.b16 %v227, %v227
    %v382 = vlaneseq
    %v383 = vshrl.u32 %v382, 7
    %v384 = vsub.s32 0, %v383
    %v385 = vrot.slane %v380, %v384
    %v387 = vpack.i.b16 %v231, %v231
    %v389 = vlaneseq
    %v390 = vshrl.u32 %v389, 7
    %v391 = vsub.s32 0, %v390
    %v392 = vrot.slane %v387, %v391
    %v394 = vpack.i.b16 %v235, %v235
    %v396 = vlaneseq
    %v397 = vshrl.u32 %v396, 7
    %v398 = vsub.s32 0, %v397
    %v399 = vrot.slane %v394, %v398
    %v401 = vpack.i.b16 %v239, %v239
    %v403 = vlaneseq
    %v404 = vshrl.u32 %v403, 7
    %v405 = vsub.s32 0, %v404
    %v406 = vrot.slane %v401, %v405
    %v408 = vpack.i.b16 %v243, %v243
    %v410 = vlaneseq
    %v411 = vshrl.u32 %v410, 7
    %v412 = vsub.s32 0, %v411
    %v413 = vrot.slane %v408, %v412
    %v415 = vpack.i.b16 %v247, %v247
    %v417 = vlaneseq
    %v418 = vshrl.u32 %v417, 7
    %v419 = vsub.s32 0, %v418
    %v420 = vrot.slane %v415, %v419
    %v422 = vpack.i.b16 %v251, %v251
    %v424 = vlaneseq
    %v425 = vshrl.u32 %v424, 7
    %v426 = vsub.s32 0, %v425
    %v427 = vrot.slane %v422, %v426
    %v429 = vpack.i.b16 %v255, %v255
    %v431 = vlaneseq
    %v432 = vshrl.u32 %v431, 7
    %v433 = vsub.s32 0, %v432
    %v434 = vrot.slane %v429, %v433
    %v436 = vpack.i.b16 %v259, %v259
    %v438 = vlaneseq
    %v439 = vshrl.u32 %v438, 7
    %v440 = vsub.s32 0, %v439
    %v441 = vrot.slane %v436, %v440
    %v443 = vpack.i.b16 %v263, %v263
    %v445 = vlaneseq
    %v446 = vshrl.u32 %v445, 7
    %v447 = vsub.s32 0, %v446
    %v448 = vrot.slane %v443, %v447
    %v450 = vpack.i.b16 %v267, %v267
    %v452 = vlaneseq
    %v453 = vshrl.u32 %v452, 7
    %v454 = vsub.s32 0, %v453
    %v455 = vrot.slane %v450, %v454
    %v457 = vpack.i.b16 %v271, %v271
    %v459 = vlaneseq
    %v460 = vshrl.u32 %v459, 7
    %v461 = vsub.s32 0, %v460
    %v462 = vrot.slane %v457, %v461
    %v464 = vpack.i.b16 %v275, %v275
    %v466 = vlaneseq
    %v467 = vshrl.u32 %v466, 7
    %v468 = vsub.s32 0, %v467
    %v469 = vrot.slane %v464, %v468
    %v471 = vpack.i.b16 %v279, %v279
    %v473 = vlaneseq
    %v474 = vshrl.u32 %v473, 7
    %v475 = vsub.s32 0, %v474
    %v476 = vrot.slane %v471, %v475
    %v478 = vpack.i.b16 %v283, %v283
    %v480 = vlaneseq
    %v481 = vshrl.u32 %v480, 7
    %v482 = vsub.s32 0, %v481
    %v483 = vrot.slane %v478, %v482
    %v485 = vpack.i.b16 %v287, %v287
    %v487 = vlaneseq
    %v488 = vshrl.u32 %v487, 7
    %v489 = vsub.s32 0, %v488
    %v490 = vrot.slane %v485, %v489
    %v492 = vpack.i.b16 %v291, %v291
    %v494 = vlaneseq
    %v495 = vshrl.u32 %v494, 7
    %v496 = vsub.s32 0, %v495
    %v497 = vrot.slane %v492, %v496
    %v499 = vpack.i.b16 %v295, %v295
    %v501 = vlaneseq
    %v502 = vshrl.u32 %v501, 7
    %v503 = vsub.s32 0, %v502
    %v504 = vrot.slane %v499, %v503
    %v506 = vpack.i.b16 %v299, %v299
    %v508 = vlaneseq
    %v509 = vshrl.u32 %v508, 7
    %v510 = vsub.s32 0, %v509
    %v511 = vrot.slane %v506, %v510
    %v513 = vpack.i.b16 %v303, %v303
    %v515 = vlaneseq
    %v516 = vshrl.u32 %v515, 7
    %v517 = vsub.s32 0, %v516
    %v518 = vrot.slane %v513, %v517
    %v520 = vpack.i.b16 %v307, %v307
    %v522 = vlaneseq
    %v523 = vshrl.u32 %v522, 7
    %v524 = vsub.s32 0, %v523
    %v525 = vrot.slane %v520, %v524
    %v527 = vpack.i.b16 %v311, %v311
    %v529 = vlaneseq
    %v530 = vshrl.u32 %v529, 7
    %v531 = vsub.s32 0, %v530
    %v532 = vrot.slane %v527, %v531
    %v534 = vpack.i.b16 %v315, %v315
    %v536 = vlaneseq
    %v537 = vshrl.u32 %v536, 7
    %v538 = vsub.s32 0, %v537
    %v539 = vrot.slane %v534, %v538
    %v572 = vunpack.c.l.b16 %v322
    %v573 = vunpack.c.l.b16 %v329
    %v574 = vunpack.c.l.b16 %v336
    %v575 = vunpack.c.l.b16 %v343
    %v576 = vunpack.c.l.b16 %v350
    %v577 = vunpack.c.l.b16 %v357
    %v578 = vunpack.c.l.b16 %v364
    %v579 = vunpack.c.l.b16 %v371
    %v580 = vunpack.c.l.b16 %v378
    %v581 = vunpack.c.l.b16 %v385
    %v582 = vunpack.c.l.b16 %v392
    %v583 = vunpack.c.l.b16 %v399
    %v584 = vunpack.c.l.b16 %v406
    %v585 = vunpack.c.l.b16 %v413
    %v586 = vunpack.c.l.b16 %v420
    %v587 = vunpack.c.l.b16 %v427
    %v588 = vunpack.c.l.b16 %v434
    %v589 = vunpack.c.l.b16 %v441
    %v590 = vunpack.c.l.b16 %v448
    %v591 = vunpack.c.l.b16 %v455
    %v592 = vunpack.c.l.b16 %v462
    %v593 = vunpack.c.l.b16 %v469
    %v594 = vunpack.c.l.b16 %v476
    %v595 = vunpack.c.l.b16 %v483
    %v596 = vunpack.c.l.b16 %v490
    %v597 = vunpack.c.l.b16 %v497
    %v598 = vunpack.c.l.b16 %v504
    %v599 = vunpack.c.l.b16 %v511
    %v600 = vunpack.c.l.b16 %v518
    %v601 = vunpack.c.l.b16 %v525
    %v602 = vunpack.c.l.b16 %v532
    %v603 = vunpack.c.l.b16 %v539
    %v604 = vpack.c.b16 %v573, %v572
    %v605 = vpack.c.b16 %v575, %v574
    %v606 = vpack.c.b16 %v577, %v576
    %v607 = vpack.c.b16 %v579, %v578
    %v608 = vpack.c.b16 %v581, %v580
    %v609 = vpack.c.b16 %v583, %v582
    %v610 = vpack.c.b16 %v585, %v584
    %v611 = vpack.c.b16 %v587, %v586
    %v612 = vpack.c.b16 %v589, %v588
    %v613 = vpack.c.b16 %v591, %v590
    %v614 = vpack.c.b16 %v593, %v592
    %v615 = vpack.c.b16 %v595, %v594
    %v616 = vpack.c.b16 %v597, %v596
    %v617 = vpack.c.b16 %v599, %v598
    %v618 = vpack.c.b16 %v601, %v600
    %v619 = vpack.c.b16 %v603, %v602
    %v636 = vmul.bf16 %v98, %v604
    %v637 = vmul.bf16 %v99, %v604
    %v638 = vmul.bf16 %v100, %v604
    %v639 = vmul.bf16 %v101, %v604
    %v640 = vmul.bf16 %v102, %v604
    %v641 = vmul.bf16 %v103, %v604
    %v642 = vmul.bf16 %v98, %v605
    %v643 = vmul.bf16 %v99, %v605
    %v644 = vmul.bf16 %v100, %v605
    %v645 = vmul.bf16 %v101, %v605
    %v646 = vmul.bf16 %v102, %v605
    %v647 = vmul.bf16 %v103, %v605
    %v648 = vmul.bf16 %v98, %v606
    %v649 = vmul.bf16 %v99, %v606
    %v650 = vmul.bf16 %v100, %v606
    %v651 = vmul.bf16 %v101, %v606
    %v652 = vmul.bf16 %v102, %v606
    %v653 = vmul.bf16 %v103, %v606
    %v654 = vmul.bf16 %v98, %v607
    %v655 = vmul.bf16 %v99, %v607
    %v656 = vmul.bf16 %v100, %v607
    %v657 = vmul.bf16 %v101, %v607
    %v658 = vmul.bf16 %v102, %v607
    %v659 = vmul.bf16 %v103, %v607
    %v660 = vmul.bf16 %v98, %v608
    %v661 = vmul.bf16 %v99, %v608
    %v662 = vmul.bf16 %v100, %v608
    %v663 = vmul.bf16 %v101, %v608
    %v664 = vmul.bf16 %v102, %v608
    %v665 = vmul.bf16 %v103, %v608
    %v666 = vmul.bf16 %v98, %v609
    %v667 = vmul.bf16 %v99, %v609
    %v668 = vmul.bf16 %v100, %v609
    %v669 = vmul.bf16 %v101, %v609
    %v670 = vmul.bf16 %v102, %v609
    %v671 = vmul.bf16 %v103, %v609
    %v672 = vmul.bf16 %v98, %v610
    %v673 = vmul.bf16 %v99, %v610
    %v674 = vmul.bf16 %v100, %v610
    %v675 = vmul.bf16 %v101, %v610
    %v676 = vmul.bf16 %v102, %v610
    %v677 = vmul.bf16 %v103, %v610
    %v678 = vmul.bf16 %v98, %v611
    %v679 = vmul.bf16 %v99, %v611
    %v680 = vmul.bf16 %v100, %v611
    %v681 = vmul.bf16 %v101, %v611
    %v682 = vmul.bf16 %v102, %v611
    %v683 = vmul.bf16 %v103, %v611
    %v684 = vmul.bf16 %v98, %v612
    %v685 = vmul.bf16 %v99, %v612
    %v686 = vmul.bf16 %v100, %v612
    %v687 = vmul.bf16 %v101, %v612
    %v688 = vmul.bf16 %v102, %v612
    %v689 = vmul.bf16 %v103, %v612
    %v690 = vmul.bf16 %v98, %v613
    %v691 = vmul.bf16 %v99, %v613
    %v692 = vmul.bf16 %v100, %v613
    %v693 = vmul.bf16 %v101, %v613
    %v694 = vmul.bf16 %v102, %v613
    %v695 = vmul.bf16 %v103, %v613
    %v696 = vmul.bf16 %v98, %v614
    %v697 = vmul.bf16 %v99, %v614
    %v698 = vmul.bf16 %v100, %v614
    %v699 = vmul.bf16 %v101, %v614
    %v700 = vmul.bf16 %v102, %v614
    %v701 = vmul.bf16 %v103, %v614
    %v702 = vmul.bf16 %v98, %v615
    %v703 = vmul.bf16 %v99, %v615
    %v704 = vmul.bf16 %v100, %v615
    %v705 = vmul.bf16 %v101, %v615
    %v706 = vmul.bf16 %v102, %v615
    %v707 = vmul.bf16 %v103, %v615
    %v708 = vmul.bf16 %v98, %v616
    %v709 = vmul.bf16 %v99, %v616
    %v710 = vmul.bf16 %v100, %v616
    %v711 = vmul.bf16 %v101, %v616
    %v712 = vmul.bf16 %v102, %v616
    %v713 = vmul.bf16 %v103, %v616
    %v714 = vmul.bf16 %v98, %v617
    %v715 = vmul.bf16 %v99, %v617
    %v716 = vmul.bf16 %v100, %v617
    %v717 = vmul.bf16 %v101, %v617
    %v718 = vmul.bf16 %v102, %v617
    %v719 = vmul.bf16 %v103, %v617
    %v720 = vmul.bf16 %v98, %v618
    %v721 = vmul.bf16 %v99, %v618
    %v722 = vmul.bf16 %v100, %v618
    %v723 = vmul.bf16 %v101, %v618
    %v724 = vmul.bf16 %v102, %v618
    %v725 = vmul.bf16 %v103, %v618
    %v726 = vmul.bf16 %v98, %v619
    %v727 = vmul.bf16 %v99, %v619
    %v728 = vmul.bf16 %v100, %v619
    %v729 = vmul.bf16 %v101, %v619
    %v730 = vmul.bf16 %v102, %v619
    %v731 = vmul.bf16 %v103, %v619
    %v732 = vld [vmem:[#allocation2] sm:$0xff]
    %v733 = vld [vmem:[#allocation2 + $0x8] sm:$0xff]
    %v734 = vld [vmem:[#allocation2 + $0x10] sm:$0xff]
    %v735 = vld [vmem:[#allocation2 + $0x18] sm:$0xff]
    %v736 = vld [vmem:[#allocation2 + $0x20] sm:$0xff]
    %v737 = vld [vmem:[#allocation2 + $0x28] sm:$0xff]
    %v738 = vld [vmem:[#allocation2 + $0x30] sm:$0xff]
    %v739 = vld [vmem:[#allocation2 + $0x38] sm:$0xff]
    %v740 = vld [vmem:[#allocation2 + $0x40] sm:$0xff]
    %v741 = vld [vmem:[#allocation2 + $0x48] sm:$0xff]
    %v742 = vld [vmem:[#allocation2 + $0x50] sm:$0xff]
    %v743 = vld [vmem:[#allocation2 + $0x58] sm:$0xff]
    %v756 = vunpack.c.l.b16 %v732
    %v757 = vunpack.c.h.b16 %v732
    %v758 = vunpack.c.l.b16 %v733
    %v759 = vunpack.c.h.b16 %v733
    %v760 = vunpack.c.l.b16 %v734
    %v761 = vunpack.c.h.b16 %v734
    %v762 = vunpack.c.l.b16 %v735
    %v763 = vunpack.c.h.b16 %v735
    %v764 = vunpack.c.l.b16 %v736
    %v765 = vunpack.c.h.b16 %v736
    %v766 = vunpack.c.l.b16 %v737
    %v767 = vunpack.c.h.b16 %v737
    %v768 = vunpack.c.l.b16 %v738
    %v769 = vunpack.c.h.b16 %v738
    %v770 = vunpack.c.l.b16 %v739
    %v771 = vunpack.c.h.b16 %v739
    %v772 = vunpack.c.l.b16 %v740
    %v773 = vunpack.c.h.b16 %v740
    %v774 = vunpack.c.l.b16 %v741
    %v775 = vunpack.c.h.b16 %v741
    %v776 = vunpack.c.l.b16 %v742
    %v777 = vunpack.c.h.b16 %v742
    %v778 = vunpack.c.l.b16 %v743
    %v779 = vunpack.c.h.b16 %v743
    %v780 = vpack.c.b16 %v762, %v756
    %v781 = vpack.c.b16 %v763, %v757
    %v782 = vpack.c.b16 %v764, %v758
    %v783 = vpack.c.b16 %v765, %v759
    %v784 = vpack.c.b16 %v766, %v760
    %v785 = vpack.c.b16 %v767, %v761
    %v786 = vpack.c.b16 %v774, %v768
    %v787 = vpack.c.b16 %v775, %v769
    %v788 = vpack.c.b16 %v776, %v770
    %v789 = vpack.c.b16 %v777, %v771
    %v790 = vpack.c.b16 %v778, %v772
    %v791 = vpack.c.b16 %v779, %v773
    %v900 = vunpack.c.l.b16 %v636
    %v901 = vunpack.c.h.b16 %v636
    %v902 = vunpack.c.l.b16 %v637
    %v903 = vunpack.c.h.b16 %v637
    %v904 = vunpack.c.l.b16 %v638
    %v905 = vunpack.c.h.b16 %v638
    %v906 = vunpack.c.l.b16 %v639
    %v907 = vunpack.c.h.b16 %v639
    %v908 = vunpack.c.l.b16 %v640
    %v909 = vunpack.c.h.b16 %v640
    %v910 = vunpack.c.l.b16 %v641
    %v911 = vunpack.c.h.b16 %v641
    %v912 = vunpack.c.l.b16 %v642
    %v913 = vunpack.c.h.b16 %v642
    %v914 = vunpack.c.l.b16 %v643
    %v915 = vunpack.c.h.b16 %v643
    %v916 = vunpack.c.l.b16 %v644
    %v917 = vunpack.c.h.b16 %v644
    %v918 = vunpack.c.l.b16 %v645
    %v919 = vunpack.c.h.b16 %v645
    %v920 = vunpack.c.l.b16 %v646
    %v921 = vunpack.c.h.b16 %v646
    %v922 = vunpack.c.l.b16 %v647
    %v923 = vunpack.c.h.b16 %v647
    %v924 = vunpack.c.l.b16 %v648
    %v925 = vunpack.c.h.b16 %v648
    %v926 = vunpack.c.l.b16 %v649
    %v927 = vunpack.c.h.b16 %v649
    %v928 = vunpack.c.l.b16 %v650
    %v929 = vunpack.c.h.b16 %v650
    %v930 = vunpack.c.l.b16 %v651
    %v931 = vunpack.c.h.b16 %v651
    %v932 = vunpack.c.l.b16 %v652
    %v933 = vunpack.c.h.b16 %v652
    %v934 = vunpack.c.l.b16 %v653
    %v935 = vunpack.c.h.b16 %v653
    %v936 = vunpack.c.l.b16 %v654
    %v937 = vunpack.c.h.b16 %v654
    %v938 = vunpack.c.l.b16 %v655
    %v939 = vunpack.c.h.b16 %v655
    %v940 = vunpack.c.l.b16 %v656
    %v941 = vunpack.c.h.b16 %v656
    %v942 = vunpack.c.l.b16 %v657
    %v943 = vunpack.c.h.b16 %v657
    %v944 = vunpack.c.l.b16 %v658
    %v945 = vunpack.c.h.b16 %v658
    %v946 = vunpack.c.l.b16 %v659
    %v947 = vunpack.c.h.b16 %v659
    %v948 = vunpack.c.l.b16 %v660
    %v949 = vunpack.c.h.b16 %v660
    %v950 = vunpack.c.l.b16 %v661
    %v951 = vunpack.c.h.b16 %v661
    %v952 = vunpack.c.l.b16 %v662
    %v953 = vunpack.c.h.b16 %v662
    %v954 = vunpack.c.l.b16 %v663
    %v955 = vunpack.c.h.b16 %v663
    %v956 = vunpack.c.l.b16 %v664
    %v957 = vunpack.c.h.b16 %v664
    %v958 = vunpack.c.l.b16 %v665
    %v959 = vunpack.c.h.b16 %v665
    %v960 = vunpack.c.l.b16 %v666
    %v961 = vunpack.c.h.b16 %v666
    %v962 = vunpack.c.l.b16 %v667
    %v963 = vunpack.c.h.b16 %v667
    %v964 = vunpack.c.l.b16 %v668
    %v965 = vunpack.c.h.b16 %v668
    %v966 = vunpack.c.l.b16 %v669
    %v967 = vunpack.c.h.b16 %v669
    %v968 = vunpack.c.l.b16 %v670
    %v969 = vunpack.c.h.b16 %v670
    %v970 = vunpack.c.l.b16 %v671
    %v971 = vunpack.c.h.b16 %v671
    %v972 = vunpack.c.l.b16 %v672
    %v973 = vunpack.c.h.b16 %v672
    %v974 = vunpack.c.l.b16 %v673
    %v975 = vunpack.c.h.b16 %v673
    %v976 = vunpack.c.l.b16 %v674
    %v977 = vunpack.c.h.b16 %v674
    %v978 = vunpack.c.l.b16 %v675
    %v979 = vunpack.c.h.b16 %v675
    %v980 = vunpack.c.l.b16 %v676
    %v981 = vunpack.c.h.b16 %v676
    %v982 = vunpack.c.l.b16 %v677
    %v983 = vunpack.c.h.b16 %v677
    %v984 = vunpack.c.l.b16 %v678
    %v985 = vunpack.c.h.b16 %v678
    %v986 = vunpack.c.l.b16 %v679
    %v987 = vunpack.c.h.b16 %v679
    %v988 = vunpack.c.l.b16 %v680
    %v989 = vunpack.c.h.b16 %v680
    %v990 = vunpack.c.l.b16 %v681
    %v991 = vunpack.c.h.b16 %v681
    %v992 = vunpack.c.l.b16 %v682
    %v993 = vunpack.c.h.b16 %v682
    %v994 = vunpack.c.l.b16 %v683
    %v995 = vunpack.c.h.b16 %v683
    %v996 = vunpack.c.l.b16 %v684
    %v997 = vunpack.c.h.b16 %v684
    %v998 = vunpack.c.l.b16 %v685
    %v999 = vunpack.c.h.b16 %v685
    %v1000 = vunpack.c.l.b16 %v686
    %v1001 = vunpack.c.h.b16 %v686
    %v1002 = vunpack.c.l.b16 %v687
    %v1003 = vunpack.c.h.b16 %v687
    %v1004 = vunpack.c.l.b16 %v688
    %v1005 = vunpack.c.h.b16 %v688
    %v1006 = vunpack.c.l.b16 %v689
    %v1007 = vunpack.c.h.b16 %v689
    %v1008 = vunpack.c.l.b16 %v690
    %v1009 = vunpack.c.h.b16 %v690
    %v1010 = vunpack.c.l.b16 %v691
    %v1011 = vunpack.c.h.b16 %v691
    %v1012 = vunpack.c.l.b16 %v692
    %v1013 = vunpack.c.h.b16 %v692
    %v1014 = vunpack.c.l.b16 %v693
    %v1015 = vunpack.c.h.b16 %v693
    %v1016 = vunpack.c.l.b16 %v694
    %v1017 = vunpack.c.h.b16 %v694
    %v1018 = vunpack.c.l.b16 %v695
    %v1019 = vunpack.c.h.b16 %v695
    %v1020 = vunpack.c.l.b16 %v696
    %v1021 = vunpack.c.h.b16 %v696
    %v1022 = vunpack.c.l.b16 %v697
    %v1023 = vunpack.c.h.b16 %v697
    %v1024 = vunpack.c.l.b16 %v698
    %v1025 = vunpack.c.h.b16 %v698
    %v1026 = vunpack.c.l.b16 %v699
    %v1027 = vunpack.c.h.b16 %v699
    %v1028 = vunpack.c.l.b16 %v700
    %v1029 = vunpack.c.h.b16 %v700
    %v1030 = vunpack.c.l.b16 %v701
    %v1031 = vunpack.c.h.b16 %v701
    %v1032 = vunpack.c.l.b16 %v702
    %v1033 = vunpack.c.h.b16 %v702
    %v1034 = vunpack.c.l.b16 %v703
    %v1035 = vunpack.c.h.b16 %v703
    %v1036 = vunpack.c.l.b16 %v704
    %v1037 = vunpack.c.h.b16 %v704
    %v1038 = vunpack.c.l.b16 %v705
    %v1039 = vunpack.c.h.b16 %v705
    %v1040 = vunpack.c.l.b16 %v706
    %v1041 = vunpack.c.h.b16 %v706
    %v1042 = vunpack.c.l.b16 %v707
    %v1043 = vunpack.c.h.b16 %v707
    %v1044 = vunpack.c.l.b16 %v708
    %v1045 = vunpack.c.h.b16 %v708
    %v1046 = vunpack.c.l.b16 %v709
    %v1047 = vunpack.c.h.b16 %v709
    %v1048 = vunpack.c.l.b16 %v710
    %v1049 = vunpack.c.h.b16 %v710
    %v1050 = vunpack.c.l.b16 %v711
    %v1051 = vunpack.c.h.b16 %v711
    %v1052 = vunpack.c.l.b16 %v712
    %v1053 = vunpack.c.h.b16 %v712
    %v1054 = vunpack.c.l.b16 %v713
    %v1055 = vunpack.c.h.b16 %v713
    %v1056 = vunpack.c.l.b16 %v714
    %v1057 = vunpack.c.h.b16 %v714
    %v1058 = vunpack.c.l.b16 %v715
    %v1059 = vunpack.c.h.b16 %v715
    %v1060 = vunpack.c.l.b16 %v716
    %v1061 = vunpack.c.h.b16 %v716
    %v1062 = vunpack.c.l.b16 %v717
    %v1063 = vunpack.c.h.b16 %v717
    %v1064 = vunpack.c.l.b16 %v718
    %v1065 = vunpack.c.h.b16 %v718
    %v1066 = vunpack.c.l.b16 %v719
    %v1067 = vunpack.c.h.b16 %v719
    %v1068 = vunpack.c.l.b16 %v720
    %v1069 = vunpack.c.h.b16 %v720
    %v1070 = vunpack.c.l.b16 %v721
    %v1071 = vunpack.c.h.b16 %v721
    %v1072 = vunpack.c.l.b16 %v722
    %v1073 = vunpack.c.h.b16 %v722
    %v1074 = vunpack.c.l.b16 %v723
    %v1075 = vunpack.c.h.b16 %v723
    %v1076 = vunpack.c.l.b16 %v724
    %v1077 = vunpack.c.h.b16 %v724
    %v1078 = vunpack.c.l.b16 %v725
    %v1079 = vunpack.c.h.b16 %v725
    %v1080 = vunpack.c.l.b16 %v726
    %v1081 = vunpack.c.h.b16 %v726
    %v1082 = vunpack.c.l.b16 %v727
    %v1083 = vunpack.c.h.b16 %v727
    %v1084 = vunpack.c.l.b16 %v728
    %v1085 = vunpack.c.h.b16 %v728
    %v1086 = vunpack.c.l.b16 %v729
    %v1087 = vunpack.c.h.b16 %v729
    %v1088 = vunpack.c.l.b16 %v730
    %v1089 = vunpack.c.h.b16 %v730
    %v1090 = vunpack.c.l.b16 %v731
    %v1091 = vunpack.c.h.b16 %v731
    %v1092 = vpack.c.b16 %v902, %v900
    %v1093 = vpack.c.b16 %v903, %v901
    %v1094 = vpack.c.b16 %v906, %v904
    %v1095 = vpack.c.b16 %v907, %v905
    %v1096 = vpack.c.b16 %v910, %v908
    %v1097 = vpack.c.b16 %v911, %v909
    %v1098 = vpack.c.b16 %v914, %v912
    %v1099 = vpack.c.b16 %v915, %v913
    %v1100 = vpack.c.b16 %v918, %v916
    %v1101 = vpack.c.b16 %v919, %v917
    %v1102 = vpack.c.b16 %v922, %v920
    %v1103 = vpack.c.b16 %v923, %v921
    %v1104 = vpack.c.b16 %v926, %v924
    %v1105 = vpack.c.b16 %v927, %v925
    %v1106 = vpack.c.b16 %v930, %v928
    %v1107 = vpack.c.b16 %v931, %v929
    %v1108 = vpack.c.b16 %v934, %v932
    %v1109 = vpack.c.b16 %v935, %v933
    %v1110 = vpack.c.b16 %v938, %v936
    %v1111 = vpack.c.b16 %v939, %v937
    %v1112 = vpack.c.b16 %v942, %v940
    %v1113 = vpack.c.b16 %v943, %v941
    %v1114 = vpack.c.b16 %v946, %v944
    %v1115 = vpack.c.b16 %v947, %v945
    %v1116 = vpack.c.b16 %v950, %v948
    %v1117 = vpack.c.b16 %v951, %v949
    %v1118 = vpack.c.b16 %v954, %v952
    %v1119 = vpack.c.b16 %v955, %v953
    %v1120 = vpack.c.b16 %v958, %v956
    %v1121 = vpack.c.b16 %v959, %v957
    %v1122 = vpack.c.b16 %v962, %v960
    %v1123 = vpack.c.b16 %v963, %v961
    %v1124 = vpack.c.b16 %v966, %v964
    %v1125 = vpack.c.b16 %v967, %v965
    %v1126 = vpack.c.b16 %v970, %v968
    %v1127 = vpack.c.b16 %v971, %v969
    %v1128 = vpack.c.b16 %v974, %v972
    %v1129 = vpack.c.b16 %v975, %v973
    %v1130 = vpack.c.b16 %v978, %v976
    %v1131 = vpack.c.b16 %v979, %v977
    %v1132 = vpack.c.b16 %v982, %v980
    %v1133 = vpack.c.b16 %v983, %v981
    %v1134 = vpack.c.b16 %v986, %v984
    %v1135 = vpack.c.b16 %v987, %v985
    %v1136 = vpack.c.b16 %v990, %v988
    %v1137 = vpack.c.b16 %v991, %v989
    %v1138 = vpack.c.b16 %v994, %v992
    %v1139 = vpack.c.b16 %v995, %v993
    %v1140 = vpack.c.b16 %v998, %v996
    %v1141 = vpack.c.b16 %v999, %v997
    %v1142 = vpack.c.b16 %v1002, %v1000
    %v1143 = vpack.c.b16 %v1003, %v1001
    %v1144 = vpack.c.b16 %v1006, %v1004
    %v1145 = vpack.c.b16 %v1007, %v1005
    %v1146 = vpack.c.b16 %v1010, %v1008
    %v1147 = vpack.c.b16 %v1011, %v1009
    %v1148 = vpack.c.b16 %v1014, %v1012
    %v1149 = vpack.c.b16 %v1015, %v1013
    %v1150 = vpack.c.b16 %v1018, %v1016
    %v1151 = vpack.c.b16 %v1019, %v1017
    %v1152 = vpack.c.b16 %v1022, %v1020
    %v1153 = vpack.c.b16 %v1023, %v1021
    %v1154 = vpack.c.b16 %v1026, %v1024
    %v1155 = vpack.c.b16 %v1027, %v1025
    %v1156 = vpack.c.b16 %v1030, %v1028
    %v1157 = vpack.c.b16 %v1031, %v1029
    %v1158 = vpack.c.b16 %v1034, %v1032
    %v1159 = vpack.c.b16 %v1035, %v1033
    %v1160 = vpack.c.b16 %v1038, %v1036
    %v1161 = vpack.c.b16 %v1039, %v1037
    %v1162 = vpack.c.b16 %v1042, %v1040
    %v1163 = vpack.c.b16 %v1043, %v1041
    %v1164 = vpack.c.b16 %v1046, %v1044
    %v1165 = vpack.c.b16 %v1047, %v1045
    %v1166 = vpack.c.b16 %v1050, %v1048
    %v1167 = vpack.c.b16 %v1051, %v1049
    %v1168 = vpack.c.b16 %v1054, %v1052
    %v1169 = vpack.c.b16 %v1055, %v1053
    %v1170 = vpack.c.b16 %v1058, %v1056
    %v1171 = vpack.c.b16 %v1059, %v1057
    %v1172 = vpack.c.b16 %v1062, %v1060
    %v1173 = vpack.c.b16 %v1063, %v1061
    %v1174 = vpack.c.b16 %v1066, %v1064
    %v1175 = vpack.c.b16 %v1067, %v1065
    %v1176 = vpack.c.b16 %v1070, %v1068
    %v1177 = vpack.c.b16 %v1071, %v1069
    %v1178 = vpack.c.b16 %v1074, %v1072
    %v1179 = vpack.c.b16 %v1075, %v1073
    %v1180 = vpack.c.b16 %v1078, %v1076
    %v1181 = vpack.c.b16 %v1079, %v1077
    %v1182 = vpack.c.b16 %v1082, %v1080
    %v1183 = vpack.c.b16 %v1083, %v1081
    %v1184 = vpack.c.b16 %v1086, %v1084
    %v1185 = vpack.c.b16 %v1087, %v1085
    %v1186 = vpack.c.b16 %v1090, %v1088
    %v1187 = vpack.c.b16 %v1091, %v1089
    %1284 = vmatprep.subr.bf16.mxu0 %v1107
    %1285 = vmatpush1.bf16.msra.mxu0 %v1106
    %1286 = vmatprep.subr.bf16.mxu0 %v1105
    %1287 = vmatpush1.bf16.msra.mxu0 %v1104
    %1288 = vmatprep.subr.bf16.mxu0 %v1103
    %1289 = vmatpush1.bf16.msra.mxu0 %v1102
    %1290 = vmatprep.subr.bf16.mxu0 %v1101
    %1291 = vmatpush1.bf16.msra.mxu0 %v1100
    %1292 = vmatprep.subr.bf16.mxu0 %v1099
    %1293 = vmatpush1.bf16.msra.mxu0 %v1098
    %1294 = vmatprep.subr.bf16.mxu0 %v1097
    %1295 = vmatpush1.bf16.msra.mxu0 %v1096
    %1296 = vmatprep.subr.bf16.mxu0 %v1095
    %1297 = vmatpush1.bf16.msra.mxu0 %v1094
    %1298 = vmatprep.subr.bf16.mxu0 %v1093
    %1299 = vmatpush1.bf16.msra.mxu0 %v1092
    %1300 = vmatprep.subr.bf16.mxu0 %v1123
    %1301 = vmatpush2.bf16.msra.mxu0 %v1122
    %1302 = vmatprep.subr.bf16.mxu0 %v1121
    %1303 = vmatpush2.bf16.msra.mxu0 %v1120
    %1304 = vmatprep.subr.bf16.mxu0 %v1119
    %1305 = vmatpush2.bf16.msra.mxu0 %v1118
    %1306 = vmatprep.subr.bf16.mxu0 %v1117
    %1307 = vmatpush2.bf16.msra.mxu0 %v1116
    %1308 = vmatprep.subr.bf16.mxu0 %v1115
    %1309 = vmatpush2.bf16.msra.mxu0 %v1114
    %1310 = vmatprep.subr.bf16.mxu0 %v1113
    %1311 = vmatpush2.bf16.msra.mxu0 %v1112
    %1312 = vmatprep.subr.bf16.mxu0 %v1111
    %1313 = vmatpush2.bf16.msra.mxu0 %v1110
    %1314 = vmatprep.subr.bf16.mxu0 %v1109
    %1315 = vmatpush2.bf16.msra.mxu0 %v1108
    %1316 = vmatprep.mubr.bf16.mxu0 %v781
    %1317 = vmatmul.mubr.bf16.gmra.mxu0 %v780
    %v1318 = vpop.f32.mrf.mxu0
    %v1319 = vadd.f32 0.0, %v1318
    %v1320 = vpop.f32.mrf.mxu0
    %v1321 = vadd.f32 0.0, %v1320
    %v1322 = vpop.f32.mrf.mxu0
    %v1323 = vadd.f32 0.0, %v1322
    %v1324 = vpop.f32.mrf.mxu0
    %v1325 = vadd.f32 0.0, %v1324
    %1326 = vmatprep.mubr.bf16.mxu0 %v787
    %1327 = vmatmul.mubr.bf16.gmra.mxu0 %v786
    %v1328 = vpop.f32.mrf.mxu0
    %v1329 = vadd.f32 0.0, %v1328
    %v1330 = vpop.f32.mrf.mxu0
    %v1331 = vadd.f32 0.0, %v1330
    %v1332 = vpop.f32.mrf.mxu0
    %v1333 = vadd.f32 0.0, %v1332
    %v1334 = vpop.f32.mrf.mxu0
    %v1335 = vadd.f32 0.0, %v1334
    %1336 = vdwg.mxu0
    %1337 = vmatprep.subr.bf16.mxu0 %v1139
    %1338 = vmatpush1.bf16.msra.mxu0 %v1138
    %1339 = vmatprep.subr.bf16.mxu0 %v1137
    %1340 = vmatpush1.bf16.msra.mxu0 %v1136
    %1341 = vmatprep.subr.bf16.mxu0 %v1135
    %1342 = vmatpush1.bf16.msra.mxu0 %v1134
    %1343 = vmatprep.subr.bf16.mxu0 %v1133
    %1344 = vmatpush1.bf16.msra.mxu0 %v1132
    %1345 = vmatprep.subr.bf16.mxu0 %v1131
    %1346 = vmatpush1.bf16.msra.mxu0 %v1130
    %1347 = vmatprep.subr.bf16.mxu0 %v1129
    %1348 = vmatpush1.bf16.msra.mxu0 %v1128
    %1349 = vmatprep.subr.bf16.mxu0 %v1127
    %1350 = vmatpush1.bf16.msra.mxu0 %v1126
    %1351 = vmatprep.subr.bf16.mxu0 %v1125
    %1352 = vmatpush1.bf16.msra.mxu0 %v1124
    %1353 = vmatprep.subr.bf16.mxu0 %v1155
    %1354 = vmatpush2.bf16.msra.mxu0 %v1154
    %1355 = vmatprep.subr.bf16.mxu0 %v1153
    %1356 = vmatpush2.bf16.msra.mxu0 %v1152
    %1357 = vmatprep.subr.bf16.mxu0 %v1151
    %1358 = vmatpush2.bf16.msra.mxu0 %v1150
    %1359 = vmatprep.subr.bf16.mxu0 %v1149
    %1360 = vmatpush2.bf16.msra.mxu0 %v1148
    %1361 = vmatprep.subr.bf16.mxu0 %v1147
    %1362 = vmatpush2.bf16.msra.mxu0 %v1146
    %1363 = vmatprep.subr.bf16.mxu0 %v1145
    %1364 = vmatpush2.bf16.msra.mxu0 %v1144
    %1365 = vmatprep.subr.bf16.mxu0 %v1143
    %1366 = vmatpush2.bf16.msra.mxu0 %v1142
    %1367 = vmatprep.subr.bf16.mxu0 %v1141
    %1368 = vmatpush2.bf16.msra.mxu0 %v1140
    %1369 = vmatprep.mubr.bf16.mxu0 %v783
    %1370 = vmatmul.mubr.bf16.gmra.mxu0 %v782
    %v1371 = vpop.f32.mrf.mxu0
    %v1372 = vadd.f32 %v1319, %v1371
    %v1373 = vpop.f32.mrf.mxu0
    %v1374 = vadd.f32 %v1321, %v1373
    %v1375 = vpop.f32.mrf.mxu0
    %v1376 = vadd.f32 %v1323, %v1375
    %v1377 = vpop.f32.mrf.mxu0
    %v1378 = vadd.f32 %v1325, %v1377
    %1379 = vmatprep.mubr.bf16.mxu0 %v789
    %1380 = vmatmul.mubr.bf16.gmra.mxu0 %v788
    %v1381 = vpop.f32.mrf.mxu0
    %v1382 = vadd.f32 %v1329, %v1381
    %v1383 = vpop.f32.mrf.mxu0
    %v1384 = vadd.f32 %v1331, %v1383
    %v1385 = vpop.f32.mrf.mxu0
    %v1386 = vadd.f32 %v1333, %v1385
    %v1387 = vpop.f32.mrf.mxu0
    %v1388 = vadd.f32 %v1335, %v1387
    %1389 = vdwg.mxu0
    %1390 = vmatprep.subr.bf16.mxu0 %v1171
    %1391 = vmatpush1.bf16.msra.mxu0 %v1170
    %1392 = vmatprep.subr.bf16.mxu0 %v1169
    %1393 = vmatpush1.bf16.msra.mxu0 %v1168
    %1394 = vmatprep.subr.bf16.mxu0 %v1167
    %1395 = vmatpush1.bf16.msra.mxu0 %v1166
    %1396 = vmatprep.subr.bf16.mxu0 %v1165
    %1397 = vmatpush1.bf16.msra.mxu0 %v1164
    %1398 = vmatprep.subr.bf16.mxu0 %v1163
    %1399 = vmatpush1.bf16.msra.mxu0 %v1162
    %1400 = vmatprep.subr.bf16.mxu0 %v1161
    %1401 = vmatpush1.bf16.msra.mxu0 %v1160
    %1402 = vmatprep.subr.bf16.mxu0 %v1159
    %1403 = vmatpush1.bf16.msra.mxu0 %v1158
    %1404 = vmatprep.subr.bf16.mxu0 %v1157
    %1405 = vmatpush1.bf16.msra.mxu0 %v1156
    %1406 = vmatprep.subr.bf16.mxu0 %v1187
    %1407 = vmatpush2.bf16.msra.mxu0 %v1186
    %1408 = vmatprep.subr.bf16.mxu0 %v1185
    %1409 = vmatpush2.bf16.msra.mxu0 %v1184
    %1410 = vmatprep.subr.bf16.mxu0 %v1183
    %1411 = vmatpush2.bf16.msra.mxu0 %v1182
    %1412 = vmatprep.subr.bf16.mxu0 %v1181
    %1413 = vmatpush2.bf16.msra.mxu0 %v1180
    %1414 = vmatprep.subr.bf16.mxu0 %v1179
    %1415 = vmatpush2.bf16.msra.mxu0 %v1178
    %1416 = vmatprep.subr.bf16.mxu0 %v1177
    %1417 = vmatpush2.bf16.msra.mxu0 %v1176
    %1418 = vmatprep.subr.bf16.mxu0 %v1175
    %1419 = vmatpush2.bf16.msra.mxu0 %v1174
    %1420 = vmatprep.subr.bf16.mxu0 %v1173
    %1421 = vmatpush2.bf16.msra.mxu0 %v1172
    %1422 = vmatprep.mubr.bf16.mxu0 %v785
    %1423 = vmatmul.mubr.bf16.gmra.mxu0 %v784
    %v1424 = vpop.f32.mrf.mxu0
    %v1425 = vadd.f32 %v1372, %v1424
    %v1426 = vpop.f32.mrf.mxu0
    %v1427 = vadd.f32 %v1374, %v1426
    %v1428 = vpop.f32.mrf.mxu0
    %v1429 = vadd.f32 %v1376, %v1428
    %v1430 = vpop.f32.mrf.mxu0
    %v1431 = vadd.f32 %v1378, %v1430
    %1432 = vmatprep.mubr.bf16.mxu0 %v791
    %1433 = vmatmul.mubr.bf16.gmra.mxu0 %v790
    %v1434 = vpop.f32.mrf.mxu0
    %v1435 = vadd.f32 %v1382, %v1434
    %v1436 = vpop.f32.mrf.mxu0
    %v1437 = vadd.f32 %v1384, %v1436
    %v1438 = vpop.f32.mrf.mxu0
    %v1439 = vadd.f32 %v1386, %v1438
    %v1440 = vpop.f32.mrf.mxu0
    %v1441 = vadd.f32 %v1388, %v1440
    %1442 = vdwg.mxu0
    %v1443 = vstv %s96
    %v1444 = vmul.f32 %v1425, %v1443
    %v1445 = vmul.f32 %v1427, %v1443
    %v1446 = vmul.f32 %v1429, %v1443
    %v1447 = vmul.f32 %v1431, %v1443
    %v1448 = vmul.f32 %v1435, %v1443
    %v1449 = vmul.f32 %v1437, %v1443
    %v1450 = vmul.f32 %v1439, %v1443
    %v1451 = vmul.f32 %v1441, %v1443
    %v1452 = vld [vmem:[%s3] sm:$0x3]
    %v1454 = vlaneseq
    %v1455 = vshrl.u32 %v1454, 7
    %v1456 = vsub.s32 0, %v1455
    %v1457 = vrot.slane %v1452, %v1456
    %v1458 = vlaneseq
    %v1459 = vshrl.u32 %v1458, 7
    %v1460 = vsub.s32 1, %v1459
    %v1461 = vrot.slane %v1452, %v1460
    %v1464 = vadd.f32 %v1444, %v1457
    %v1465 = vadd.f32 %v1445, %v1461
    %v1466 = vadd.f32 %v1446, %v1457
    %v1467 = vadd.f32 %v1447, %v1461
    %v1468 = vadd.f32 %v1448, %v1457
    %v1469 = vadd.f32 %v1449, %v1461
    %v1470 = vadd.f32 %v1450, %v1457
    %v1471 = vadd.f32 %v1451, %v1461
    %v1472 = vmax.f32 %v1464, 0.0
    %v1473 = vmax.f32 %v1465, 0.0
    %v1474 = vmax.f32 %v1466, 0.0
    %v1475 = vmax.f32 %v1467, 0.0
    %v1476 = vmax.f32 %v1468, 0.0
    %v1477 = vmax.f32 %v1469, 0.0
    %v1478 = vmax.f32 %v1470, 0.0
    %v1479 = vmax.f32 %v1471, 0.0
    %v1480 = vmax.f32 %v1472, %v1476
    %v1481 = vmax.f32 %v1473, %v1477
    %v1482 = vmax.f32 %v1474, %v1478
    %v1483 = vmax.f32 %v1475, %v1479
    %v1484 = vmax.f32 %v1480, %v1481
    %v1485 = vmax.f32 %v1482, %v1483
    %v1486 = vmax.f32 %v1484, %v1485
    %1487 = vmax.xlane.f32.xlu0 %v1486
    %v1488 = vpop.xlane.xlu0 %1487
    %v1489 = vrot.slane %v1488, 4
    %v1490 = vmax.f32 %v1488, %v1489
    %v1491 = vrot.slane %v1490, 2
    %v1492 = vmax.f32 %v1490, %v1491
    %v1493 = vrot.slane %v1492, 1
    %v1494 = vmax.f32 %v1492, %v1493
    %s1495 = vtos %v1494
    %v1496 = vstv %s1495
    %v1497 = vmul.f32 %v1496, 0.003921569
    %v1498 = vmax.f32 %v1497, 1e-08
    %v1499 = vrcp.pop %v1498
    %v1500 = vmul.f32 %v1472, %v1499
    %v1501 = vmul.f32 %v1473, %v1499
    %v1502 = vmul.f32 %v1474, %v1499
    %v1503 = vmul.f32 %v1475, %v1499
    %v1504 = vmul.f32 %v1476, %v1499
    %v1505 = vmul.f32 %v1477, %v1499
    %v1506 = vmul.f32 %v1478, %v1499
    %v1507 = vmul.f32 %v1479, %v1499
    %v1508 = vround.ne.pseudo %v1500
    %v1509 = vround.ne.pseudo %v1501
    %v1510 = vround.ne.pseudo %v1502
    %v1511 = vround.ne.pseudo %v1503
    %v1512 = vround.ne.pseudo %v1504
    %v1513 = vround.ne.pseudo %v1505
    %v1514 = vround.ne.pseudo %v1506
    %v1515 = vround.ne.pseudo %v1507
    %v1516 = vmin.f32 %v1508, 255.0
    %v1517 = vmin.f32 %v1509, 255.0
    %v1518 = vmin.f32 %v1510, 255.0
    %v1519 = vmin.f32 %v1511, 255.0
    %v1520 = vmin.f32 %v1512, 255.0
    %v1521 = vmin.f32 %v1513, 255.0
    %v1522 = vmin.f32 %v1514, 255.0
    %v1523 = vmin.f32 %v1515, 255.0
    %v1524 = vpack.c.bf16 %v1518, %v1516
    %v1525 = vpack.c.bf16 %v1519, %v1517
    %v1526 = vpack.c.bf16 %v1522, %v1520
    %v1527 = vpack.c.bf16 %v1523, %v1521
    %v1530 = vrot.slane %v1524, 1
    %v1531 = vrot.slane %v1525, 1
    %v1534 = vrot.slane %v1524, 2
    %v1535 = vrot.slane %v1525, 2
    %v1538 = vrot.slane %v1524, 3
    %v1539 = vrot.slane %v1525, 3
    %v1542 = vrot.slane %v1524, 4
    %v1543 = vrot.slane %v1525, 4
    %v1546 = vrot.slane %v1524, 5
    %v1547 = vrot.slane %v1525, 5
    %v1550 = vrot.slane %v1524, 6
    %v1551 = vrot.slane %v1525, 6
    %v1554 = vrot.slane %v1524, 7
    %v1555 = vrot.slane %v1525, 7
    %v1560 = vrot.slane %v1526, 1
    %v1561 = vrot.slane %v1527, 1
    %v1564 = vrot.slane %v1526, 2
    %v1565 = vrot.slane %v1527, 2
    %v1568 = vrot.slane %v1526, 3
    %v1569 = vrot.slane %v1527, 3
    %v1572 = vrot.slane %v1526, 4
    %v1573 = vrot.slane %v1527, 4
    %v1576 = vrot.slane %v1526, 5
    %v1577 = vrot.slane %v1527, 5
    %v1580 = vrot.slane %v1526, 6
    %v1581 = vrot.slane %v1527, 6
    %v1584 = vrot.slane %v1526, 7
    %v1585 = vrot.slane %v1527, 7
    %v1588 = vld [vmem:[#allocation9] sm:$0xff]
    %v1589 = vld [vmem:[#allocation9 + $0x8] sm:$0xff]
    %v1590 = vld [vmem:[#allocation9 + $0x10] sm:$0xff]
    %v1591 = vld [vmem:[#allocation9 + $0x18] sm:$0xff]
    %v1592 = vld [vmem:[#allocation9 + $0x20] sm:$0xff]
    %v1593 = vld [vmem:[#allocation9 + $0x28] sm:$0xff]
    %v1594 = vld [vmem:[#allocation9 + $0x30] sm:$0xff]
    %v1595 = vld [vmem:[#allocation9 + $0x38] sm:$0xff]
    %v1596 = vld [vmem:[#allocation9 + $0x40] sm:$0xff]
    %v1597 = vld [vmem:[#allocation9 + $0x48] sm:$0xff]
    %v1598 = vld [vmem:[#allocation9 + $0x50] sm:$0xff]
    %v1599 = vld [vmem:[#allocation9 + $0x58] sm:$0xff]
    %v1600 = vld [vmem:[#allocation9 + $0x60] sm:$0xff]
    %v1601 = vld [vmem:[#allocation9 + $0x68] sm:$0xff]
    %v1602 = vld [vmem:[#allocation9 + $0x70] sm:$0xff]
    %v1603 = vld [vmem:[#allocation9 + $0x78] sm:$0xff]
    %v1604 = vld [vmem:[#allocation9 + $0x80] sm:$0xff]
    %v1605 = vld [vmem:[#allocation9 + $0x88] sm:$0xff]
    %v1606 = vld [vmem:[#allocation9 + $0x90] sm:$0xff]
    %v1607 = vld [vmem:[#allocation9 + $0x98] sm:$0xff]
    %v1608 = vld [vmem:[#allocation9 + $0xa0] sm:$0xff]
    %v1609 = vld [vmem:[#allocation9 + $0xa8] sm:$0xff]
    %v1610 = vld [vmem:[#allocation9 + $0xb0] sm:$0xff]
    %v1611 = vld [vmem:[#allocation9 + $0xb8] sm:$0xff]
    %v1612 = vld [vmem:[#allocation9 + $0xc0] sm:$0xff]
    %v1613 = vld [vmem:[#allocation9 + $0xc8] sm:$0xff]
    %v1614 = vld [vmem:[#allocation9 + $0xd0] sm:$0xff]
    %v1615 = vld [vmem:[#allocation9 + $0xd8] sm:$0xff]
    %v1616 = vld [vmem:[#allocation9 + $0xe0] sm:$0xff]
    %v1617 = vld [vmem:[#allocation9 + $0xe8] sm:$0xff]
    %v1618 = vld [vmem:[#allocation9 + $0xf0] sm:$0xff]
    %v1619 = vld [vmem:[#allocation9 + $0xf8] sm:$0xff]
    %v1620 = vld [vmem:[#allocation9 + $0x100] sm:$0xff]
    %v1621 = vld [vmem:[#allocation9 + $0x108] sm:$0xff]
    %v1622 = vld [vmem:[#allocation9 + $0x110] sm:$0xff]
    %v1623 = vld [vmem:[#allocation9 + $0x118] sm:$0xff]
    %v1624 = vld [vmem:[#allocation9 + $0x120] sm:$0xff]
    %v1625 = vld [vmem:[#allocation9 + $0x128] sm:$0xff]
    %v1626 = vld [vmem:[#allocation9 + $0x130] sm:$0xff]
    %v1627 = vld [vmem:[#allocation9 + $0x138] sm:$0xff]
    %v1628 = vld [vmem:[#allocation9 + $0x140] sm:$0xff]
    %v1629 = vld [vmem:[#allocation9 + $0x148] sm:$0xff]
    %v1630 = vld [vmem:[#allocation9 + $0x150] sm:$0xff]
    %v1631 = vld [vmem:[#allocation9 + $0x158] sm:$0xff]
    %v1632 = vld [vmem:[#allocation9 + $0x160] sm:$0xff]
    %v1633 = vld [vmem:[#allocation9 + $0x168] sm:$0xff]
    %v1634 = vld [vmem:[#allocation9 + $0x170] sm:$0xff]
    %v1635 = vld [vmem:[#allocation9 + $0x178] sm:$0xff]
    %v1636 = vld [vmem:[#allocation9 + $0x180] sm:$0xff]
    %v1637 = vld [vmem:[#allocation9 + $0x188] sm:$0xff]
    %v1638 = vld [vmem:[#allocation9 + $0x190] sm:$0xff]
    %v1639 = vld [vmem:[#allocation9 + $0x198] sm:$0xff]
    %v1640 = vld [vmem:[#allocation9 + $0x1a0] sm:$0xff]
    %v1641 = vld [vmem:[#allocation9 + $0x1a8] sm:$0xff]
    %v1642 = vld [vmem:[#allocation9 + $0x1b0] sm:$0xff]
    %v1643 = vld [vmem:[#allocation9 + $0x1b8] sm:$0xff]
    %v1644 = vld [vmem:[#allocation9 + $0x1c0] sm:$0xff]
    %v1645 = vld [vmem:[#allocation9 + $0x1c8] sm:$0xff]
    %v1646 = vld [vmem:[#allocation9 + $0x1d0] sm:$0xff]
    %v1647 = vld [vmem:[#allocation9 + $0x1d8] sm:$0xff]
    %v1648 = vld [vmem:[#allocation9 + $0x1e0] sm:$0xff]
    %v1649 = vld [vmem:[#allocation9 + $0x1e8] sm:$0xff]
    %v1650 = vld [vmem:[#allocation9 + $0x1f0] sm:$0xff]
    %v1651 = vld [vmem:[#allocation9 + $0x1f8] sm:$0xff]
    %v1716 = vunpack.c.l.b16 %v1588
    %v1717 = vunpack.c.h.b16 %v1588
    %v1718 = vunpack.c.l.b16 %v1589
    %v1719 = vunpack.c.h.b16 %v1589
    %v1720 = vunpack.c.l.b16 %v1590
    %v1721 = vunpack.c.h.b16 %v1590
    %v1722 = vunpack.c.l.b16 %v1591
    %v1723 = vunpack.c.h.b16 %v1591
    %v1724 = vunpack.c.l.b16 %v1592
    %v1725 = vunpack.c.h.b16 %v1592
    %v1726 = vunpack.c.l.b16 %v1593
    %v1727 = vunpack.c.h.b16 %v1593
    %v1728 = vunpack.c.l.b16 %v1594
    %v1729 = vunpack.c.h.b16 %v1594
    %v1730 = vunpack.c.l.b16 %v1595
    %v1731 = vunpack.c.h.b16 %v1595
    %v1732 = vunpack.c.l.b16 %v1596
    %v1733 = vunpack.c.h.b16 %v1596
    %v1734 = vunpack.c.l.b16 %v1597
    %v1735 = vunpack.c.h.b16 %v1597
    %v1736 = vunpack.c.l.b16 %v1598
    %v1737 = vunpack.c.h.b16 %v1598
    %v1738 = vunpack.c.l.b16 %v1599
    %v1739 = vunpack.c.h.b16 %v1599
    %v1740 = vunpack.c.l.b16 %v1600
    %v1741 = vunpack.c.h.b16 %v1600
    %v1742 = vunpack.c.l.b16 %v1601
    %v1743 = vunpack.c.h.b16 %v1601
    %v1744 = vunpack.c.l.b16 %v1602
    %v1745 = vunpack.c.h.b16 %v1602
    %v1746 = vunpack.c.l.b16 %v1603
    %v1747 = vunpack.c.h.b16 %v1603
    %v1748 = vunpack.c.l.b16 %v1604
    %v1749 = vunpack.c.h.b16 %v1604
    %v1750 = vunpack.c.l.b16 %v1605
    %v1751 = vunpack.c.h.b16 %v1605
    %v1752 = vunpack.c.l.b16 %v1606
    %v1753 = vunpack.c.h.b16 %v1606
    %v1754 = vunpack.c.l.b16 %v1607
    %v1755 = vunpack.c.h.b16 %v1607
    %v1756 = vunpack.c.l.b16 %v1608
    %v1757 = vunpack.c.h.b16 %v1608
    %v1758 = vunpack.c.l.b16 %v1609
    %v1759 = vunpack.c.h.b16 %v1609
    %v1760 = vunpack.c.l.b16 %v1610
    %v1761 = vunpack.c.h.b16 %v1610
    %v1762 = vunpack.c.l.b16 %v1611
    %v1763 = vunpack.c.h.b16 %v1611
    %v1764 = vunpack.c.l.b16 %v1612
    %v1765 = vunpack.c.h.b16 %v1612
    %v1766 = vunpack.c.l.b16 %v1613
    %v1767 = vunpack.c.h.b16 %v1613
    %v1768 = vunpack.c.l.b16 %v1614
    %v1769 = vunpack.c.h.b16 %v1614
    %v1770 = vunpack.c.l.b16 %v1615
    %v1771 = vunpack.c.h.b16 %v1615
    %v1772 = vunpack.c.l.b16 %v1616
    %v1773 = vunpack.c.h.b16 %v1616
    %v1774 = vunpack.c.l.b16 %v1617
    %v1775 = vunpack.c.h.b16 %v1617
    %v1776 = vunpack.c.l.b16 %v1618
    %v1777 = vunpack.c.h.b16 %v1618
    %v1778 = vunpack.c.l.b16 %v1619
    %v1779 = vunpack.c.h.b16 %v1619
    %v1780 = vunpack.c.l.b16 %v1620
    %v1781 = vunpack.c.h.b16 %v1620
    %v1782 = vunpack.c.l.b16 %v1621
    %v1783 = vunpack.c.h.b16 %v1621
    %v1784 = vunpack.c.l.b16 %v1622
    %v1785 = vunpack.c.h.b16 %v1622
    %v1786 = vunpack.c.l.b16 %v1623
    %v1787 = vunpack.c.h.b16 %v1623
    %v1788 = vunpack.c.l.b16 %v1624
    %v1789 = vunpack.c.h.b16 %v1624
    %v1790 = vunpack.c.l.b16 %v1625
    %v1791 = vunpack.c.h.b16 %v1625
    %v1792 = vunpack.c.l.b16 %v1626
    %v1793 = vunpack.c.h.b16 %v1626
    %v1794 = vunpack.c.l.b16 %v1627
    %v1795 = vunpack.c.h.b16 %v1627
    %v1796 = vunpack.c.l.b16 %v1628
    %v1797 = vunpack.c.h.b16 %v1628
    %v1798 = vunpack.c.l.b16 %v1629
    %v1799 = vunpack.c.h.b16 %v1629
    %v1800 = vunpack.c.l.b16 %v1630
    %v1801 = vunpack.c.h.b16 %v1630
    %v1802 = vunpack.c.l.b16 %v1631
    %v1803 = vunpack.c.h.b16 %v1631
    %v1804 = vunpack.c.l.b16 %v1632
    %v1805 = vunpack.c.h.b16 %v1632
    %v1806 = vunpack.c.l.b16 %v1633
    %v1807 = vunpack.c.h.b16 %v1633
    %v1808 = vunpack.c.l.b16 %v1634
    %v1809 = vunpack.c.h.b16 %v1634
    %v1810 = vunpack.c.l.b16 %v1635
    %v1811 = vunpack.c.h.b16 %v1635
    %v1812 = vunpack.c.l.b16 %v1636
    %v1813 = vunpack.c.h.b16 %v1636
    %v1814 = vunpack.c.l.b16 %v1637
    %v1815 = vunpack.c.h.b16 %v1637
    %v1816 = vunpack.c.l.b16 %v1638
    %v1817 = vunpack.c.h.b16 %v1638
    %v1818 = vunpack.c.l.b16 %v1639
    %v1819 = vunpack.c.h.b16 %v1639
    %v1820 = vunpack.c.l.b16 %v1640
    %v1821 = vunpack.c.h.b16 %v1640
    %v1822 = vunpack.c.l.b16 %v1641
    %v1823 = vunpack.c.h.b16 %v1641
    %v1824 = vunpack.c.l.b16 %v1642
    %v1825 = vunpack.c.h.b16 %v1642
    %v1826 = vunpack.c.l.b16 %v1643
    %v1827 = vunpack.c.h.b16 %v1643
    %v1828 = vunpack.c.l.b16 %v1644
    %v1829 = vunpack.c.h.b16 %v1644
    %v1830 = vunpack.c.l.b16 %v1645
    %v1831 = vunpack.c.h.b16 %v1645
    %v1832 = vunpack.c.l.b16 %v1646
    %v1833 = vunpack.c.h.b16 %v1646
    %v1834 = vunpack.c.l.b16 %v1647
    %v1835 = vunpack.c.h.b16 %v1647
    %v1836 = vunpack.c.l.b16 %v1648
    %v1837 = vunpack.c.h.b16 %v1648
    %v1838 = vunpack.c.l.b16 %v1649
    %v1839 = vunpack.c.h.b16 %v1649
    %v1840 = vunpack.c.l.b16 %v1650
    %v1841 = vunpack.c.h.b16 %v1650
    %v1842 = vunpack.c.l.b16 %v1651
    %v1843 = vunpack.c.h.b16 %v1651
    %v1844 = vpack.c.b16 %v1748, %v1716
    %v1845 = vpack.c.b16 %v1749, %v1717
    %v1846 = vpack.c.b16 %v1750, %v1718
    %v1847 = vpack.c.b16 %v1751, %v1719
    %v1848 = vpack.c.b16 %v1752, %v1720
    %v1849 = vpack.c.b16 %v1753, %v1721
    %v1850 = vpack.c.b16 %v1754, %v1722
    %v1851 = vpack.c.b16 %v1755, %v1723
    %v1852 = vpack.c.b16 %v1756, %v1724
    %v1853 = vpack.c.b16 %v1757, %v1725
    %v1854 = vpack.c.b16 %v1758, %v1726
    %v1855 = vpack.c.b16 %v1759, %v1727
    %v1856 = vpack.c.b16 %v1760, %v1728
    %v1857 = vpack.c.b16 %v1761, %v1729
    %v1858 = vpack.c.b16 %v1762, %v1730
    %v1859 = vpack.c.b16 %v1763, %v1731
    %v1860 = vpack.c.b16 %v1764, %v1732
    %v1861 = vpack.c.b16 %v1765, %v1733
    %v1862 = vpack.c.b16 %v1766, %v1734
    %v1863 = vpack.c.b16 %v1767, %v1735
    %v1864 = vpack.c.b16 %v1768, %v1736
    %v1865 = vpack.c.b16 %v1769, %v1737
    %v1866 = vpack.c.b16 %v1770, %v1738
    %v1867 = vpack.c.b16 %v1771, %v1739
    %v1868 = vpack.c.b16 %v1772, %v1740
    %v1869 = vpack.c.b16 %v1773, %v1741
    %v1870 = vpack.c.b16 %v1774, %v1742
    %v1871 = vpack.c.b16 %v1775, %v1743
    %v1872 = vpack.c.b16 %v1776, %v1744
    %v1873 = vpack.c.b16 %v1777, %v1745
    %v1874 = vpack.c.b16 %v1778, %v1746
    %v1875 = vpack.c.b16 %v1779, %v1747
    %v1876 = vpack.c.b16 %v1812, %v1780
    %v1877 = vpack.c.b16 %v1813, %v1781
    %v1878 = vpack.c.b16 %v1814, %v1782
    %v1879 = vpack.c.b16 %v1815, %v1783
    %v1880 = vpack.c.b16 %v1816, %v1784
    %v1881 = vpack.c.b16 %v1817, %v1785
    %v1882 = vpack.c.b16 %v1818, %v1786
    %v1883 = vpack.c.b16 %v1819, %v1787
    %v1884 = vpack.c.b16 %v1820, %v1788
    %v1885 = vpack.c.b16 %v1821, %v1789
    %v1886 = vpack.c.b16 %v1822, %v1790
    %v1887 = vpack.c.b16 %v1823, %v1791
    %v1888 = vpack.c.b16 %v1824, %v1792
    %v1889 = vpack.c.b16 %v1825, %v1793
    %v1890 = vpack.c.b16 %v1826, %v1794
    %v1891 = vpack.c.b16 %v1827, %v1795
    %v1892 = vpack.c.b16 %v1828, %v1796
    %v1893 = vpack.c.b16 %v1829, %v1797
    %v1894 = vpack.c.b16 %v1830, %v1798
    %v1895 = vpack.c.b16 %v1831, %v1799
    %v1896 = vpack.c.b16 %v1832, %v1800
    %v1897 = vpack.c.b16 %v1833, %v1801
    %v1898 = vpack.c.b16 %v1834, %v1802
    %v1899 = vpack.c.b16 %v1835, %v1803
    %v1900 = vpack.c.b16 %v1836, %v1804
    %v1901 = vpack.c.b16 %v1837, %v1805
    %v1902 = vpack.c.b16 %v1838, %v1806
    %v1903 = vpack.c.b16 %v1839, %v1807
    %v1904 = vpack.c.b16 %v1840, %v1808
    %v1905 = vpack.c.b16 %v1841, %v1809
    %v1906 = vpack.c.b16 %v1842, %v1810
    %v1907 = vpack.c.b16 %v1843, %v1811
    %1972 = vmatprep.subr.bf16.mxu0 0
    %1973 = vmatpush1.bf16.xpose.msra.mxu0 0
    %1974 = vmatprep.subr.bf16.mxu0 0
    %1975 = vmatpush1.bf16.xpose.msra.mxu0 0
    %1976 = vmatprep.subr.bf16.mxu0 0
    %1977 = vmatpush1.bf16.xpose.msra.mxu0 0
    %1978 = vmatprep.subr.bf16.mxu0 0
    %1979 = vmatpush1.bf16.xpose.msra.mxu0 0
    %1980 = vmatprep.subr.bf16.mxu0 0
    %1981 = vmatpush1.bf16.xpose.msra.mxu0 0
    %1982 = vmatprep.subr.bf16.mxu0 0
    %1983 = vmatpush1.bf16.xpose.msra.mxu0 0
    %1984 = vmatprep.subr.bf16.mxu0 %v1877
    %1985 = vmatpush1.bf16.xpose.msra.mxu0 %v1876
    %1986 = vmatprep.subr.bf16.mxu0 %v1845
    %1987 = vmatpush1.bf16.xpose.msra.mxu0 %v1844
    %1988 = vmatprep.subr.bf16.mxu0 0
    %1989 = vmatpush2.bf16.xpose.msra.mxu0 0
    %1990 = vmatprep.subr.bf16.mxu0 0
    %1991 = vmatpush2.bf16.xpose.msra.mxu0 0
    %1992 = vmatprep.subr.bf16.mxu0 0
    %1993 = vmatpush2.bf16.xpose.msra.mxu0 0
    %1994 = vmatprep.subr.bf16.mxu0 0
    %1995 = vmatpush2.bf16.xpose.msra.mxu0 0
    %1996 = vmatprep.subr.bf16.mxu0 0
    %1997 = vmatpush2.bf16.xpose.msra.mxu0 0
    %1998 = vmatprep.subr.bf16.mxu0 0
    %1999 = vmatpush2.bf16.xpose.msra.mxu0 0
    %2000 = vmatprep.subr.bf16.mxu0 0
    %2001 = vmatpush2.bf16.xpose.msra.mxu0 0
    %2002 = vmatprep.subr.bf16.mxu0 0
    %2003 = vmatpush2.bf16.xpose.msra.mxu0 0
    %2004 = vmatprep.mubr.bf16.mxu0 %v1525
    %2005 = vmatmul.mubr.bf16.gmra.mxu0 %v1524
    %v2006 = vpop.f32.mrf.mxu0
    %v2007 = vadd.f32 0.0, %v2006
    %v2008 = vpop.f32.mrf.mxu0
    %v2009 = vpop.f32.mrf.mxu0
    %v2010 = vpop.f32.mrf.mxu0
    %2011 = vdwg.mxu0
    %2012 = vmatprep.subr.bf16.mxu0 0
    %2013 = vmatpush1.bf16.xpose.msra.mxu0 0
    %2014 = vmatprep.subr.bf16.mxu0 0
    %2015 = vmatpush1.bf16.xpose.msra.mxu0 0
    %2016 = vmatprep.subr.bf16.mxu0 0
    %2017 = vmatpush1.bf16.xpose.msra.mxu0 0
    %2018 = vmatprep.subr.bf16.mxu0 0
    %2019 = vmatpush1.bf16.xpose.msra.mxu0 0
    %2020 = vmatprep.subr.bf16.mxu0 0
    %2021 = vmatpush1.bf16.xpose.msra.mxu0 0
    %2022 = vmatprep.subr.bf16.mxu0 0
    %2023 = vmatpush1.bf16.xpose.msra.mxu0 0
    %2024 = vmatprep.subr.bf16.mxu0 %v1879
    %2025 = vmatpush1.bf16.xpose.msra.mxu0 %v1878
    %2026 = vmatprep.subr.bf16.mxu0 %v1847
    %2027 = vmatpush1.bf16.xpose.msra.mxu0 %v1846
    %2028 = vmatprep.subr.bf16.mxu0 0
    %2029 = vmatpush2.bf16.xpose.msra.mxu0 0
    %2030 = vmatprep.subr.bf16.mxu0 0
    %2031 = vmatpush2.bf16.xpose.msra.mxu0 0
    %2032 = vmatprep.subr.bf16.mxu0 0
    %2033 = vmatpush2.bf16.xpose.msra.mxu0 0
    %2034 = vmatprep.subr.bf16.mxu0 0
    %2035 = vmatpush2.bf16.xpose.msra.mxu0 0
    %2036 = vmatprep.subr.bf16.mxu0 0
    %2037 = vmatpush2.bf16.xpose.msra.mxu0 0
    %2038 = vmatprep.subr.bf16.mxu0 0
    %2039 = vmatpush2.bf16.xpose.msra.mxu0 0
    %2040 = vmatprep.subr.bf16.mxu0 0
    %2041 = vmatpush2.bf16.xpose.msra.mxu0 0
    %2042 = vmatprep.subr.bf16.mxu0 0
    %2043 = vmatpush2.bf16.xpose.msra.mxu0 0
    %2044 = vmatprep.mubr.bf16.mxu0 %v1531
    %2045 = vmatmul.mubr.bf16.gmra.mxu0 %v1530
    %v2046 = vpop.f32.mrf.mxu0
    %v2047 = vadd.f32 %v2007, %v2046
    %v2048 = vpop.f32.mrf.mxu0
    %v2049 = vpop.f32.mrf.mxu0
    %v2050 = vpop.f32.mrf.mxu0
    %2051 = vdwg.mxu0
    %2052 = vmatprep.subr.bf16.mxu0 0
    %2053 = vmatpush1.bf16.xpose.msra.mxu0 0
    %2054 = vmatprep.subr.bf16.mxu0 0
    %2055 = vmatpush1.bf16.xpose.msra.mxu0 0
    %2056 = vmatprep.subr.bf16.mxu0 0
    %2057 = vmatpush1.bf16.xpose.msra.mxu0 0
    %2058 = vmatprep.subr.bf16.mxu0 0
    %2059 = vmatpush1.bf16.xpose.msra.mxu0 0
    %2060 = vmatprep.subr.bf16.mxu0 0
    %2061 = vmatpush1.bf16.xpose.msra.mxu0 0
    %2062 = vmatprep.subr.bf16.mxu0 0
    %2063 = vmatpush1.bf16.xpose.msra.mxu0 0
    %2064 = vmatprep.subr.bf16.mxu0 %v1881
    %2065 = vmatpush1.bf16.xpose.msra.mxu0 %v1880
    %2066 = vmatprep.subr.bf16.mxu0 %v1849
    %2067 = vmatpush1.bf16.xpose.msra.mxu0 %v1848
    %2068 = vmatprep.subr.bf16.mxu0 0
    %2069 = vmatpush2.bf16.xpose.msra.mxu0 0
    %2070 = vmatprep.subr.bf16.mxu0 0
    %2071 = vmatpush2.bf16.xpose.msra.mxu0 0
    %2072 = vmatprep.subr.bf16.mxu0 0
    %2073 = vmatpush2.bf16.xpose.msra.mxu0 0
    %2074 = vmatprep.subr.bf16.mxu0 0
    %2075 = vmatpush2.bf16.xpose.msra.mxu0 0
    %2076 = vmatprep.subr.bf16.mxu0 0
    %2077 = vmatpush2.bf16.xpose.msra.mxu0 0
    %2078 = vmatprep.subr.bf16.mxu0 0
    %2079 = vmatpush2.bf16.xpose.msra.mxu0 0
    %2080 = vmatprep.subr.bf16.mxu0 0
    %2081 = vmatpush2.bf16.xpose.msra.mxu0 0
    %2082 = vmatprep.subr.bf16.mxu0 0
    %2083 = vmatpush2.bf16.xpose.msra.mxu0 0
    %2084 = vmatprep.mubr.bf16.mxu0 %v1535
    %2085 = vmatmul.mubr.bf16.gmra.mxu0 %v1534
    %v2086 = vpop.f32.mrf.mxu0
    %v2087 = vadd.f32 %v2047, %v2086
    %v2088 = vpop.f32.mrf.mxu0
    %v2089 = vpop.f32.mrf.mxu0
    %v2090 = vpop.f32.mrf.mxu0
    %2091 = vdwg.mxu0
    %2092 = vmatprep.subr.bf16.mxu0 0
    %2093 = vmatpush1.bf16.xpose.msra.mxu0 0
    %2094 = vmatprep.subr.bf16.mxu0 0
    %2095 = vmatpush1.bf16.xpose.msra.mxu0 0
    %2096 = vmatprep.subr.bf16.mxu0 0
    %2097 = vmatpush1.bf16.xpose.msra.mxu0 0
    %2098 = vmatprep.subr.bf16.mxu0 0
    %2099 = vmatpush1.bf16.xpose.msra.mxu0 0
    %2100 = vmatprep.subr.bf16.mxu0 0
    %2101 = vmatpush1.bf16.xpose.msra.mxu0 0
    %2102 = vmatprep.subr.bf16.mxu0 0
    %2103 = vmatpush1.bf16.xpose.msra.mxu0 0
    %2104 = vmatprep.subr.bf16.mxu0 %v1883
    %2105 = vmatpush1.bf16.xpose.msra.mxu0 %v1882
    %2106 = vmatprep.subr.bf16.mxu0 %v1851
    %2107 = vmatpush1.bf16.xpose.msra.mxu0 %v1850
    %2108 = vmatprep.subr.bf16.mxu0 0
    %2109 = vmatpush2.bf16.xpose.msra.mxu0 0
    %2110 = vmatprep.subr.bf16.mxu0 0
    %2111 = vmatpush2.bf16.xpose.msra.mxu0 0
    %2112 = vmatprep.subr.bf16.mxu0 0
    %2113 = vmatpush2.bf16.xpose.msra.mxu0 0
    %2114 = vmatprep.subr.bf16.mxu0 0
    %2115 = vmatpush2.bf16.xpose.msra.mxu0 0
    %2116 = vmatprep.subr.bf16.mxu0 0
    %2117 = vmatpush2.bf16.xpose.msra.mxu0 0
    %2118 = vmatprep.subr.bf16.mxu0 0
    %2119 = vmatpush2.bf16.xpose.msra.mxu0 0
    %2120 = vmatprep.subr.bf16.mxu0 0
    %2121 = vmatpush2.bf16.xpose.msra.mxu0 0
    %2122 = vmatprep.subr.bf16.mxu0 0
    %2123 = vmatpush2.bf16.xpose.msra.mxu0 0
    %2124 = vmatprep.mubr.bf16.mxu0 %v1539
    %2125 = vmatmul.mubr.bf16.gmra.mxu0 %v1538
    %v2126 = vpop.f32.mrf.mxu0
    %v2127 = vadd.f32 %v2087, %v2126
    %v2128 = vpop.f32.mrf.mxu0
    %v2129 = vpop.f32.mrf.mxu0
    %v2130 = vpop.f32.mrf.mxu0
    %2131 = vdwg.mxu0
    %2132 = vmatprep.subr.bf16.mxu0 0
    %2133 = vmatpush1.bf16.xpose.msra.mxu0 0
    %2134 = vmatprep.subr.bf16.mxu0 0
    %2135 = vmatpush1.bf16.xpose.msra.mxu0 0
    %2136 = vmatprep.subr.bf16.mxu0 0
    %2137 = vmatpush1.bf16.xpose.msra.mxu0 0
    %2138 = vmatprep.subr.bf16.mxu0 0
    %2139 = vmatpush1.bf16.xpose.msra.mxu0 0
    %2140 = vmatprep.subr.bf16.mxu0 0
    %2141 = vmatpush1.bf16.xpose.msra.mxu0 0
    %2142 = vmatprep.subr.bf16.mxu0 0
    %2143 = vmatpush1.bf16.xpose.msra.mxu0 0
    %2144 = vmatprep.subr.bf16.mxu0 %v1885
    %2145 = vmatpush1.bf16.xpose.msra.mxu0 %v1884
    %2146 = vmatprep.subr.bf16.mxu0 %v1853
    %2147 = vmatpush1.bf16.xpose.msra.mxu0 %v1852
    %2148 = vmatprep.subr.bf16.mxu0 0
    %2149 = vmatpush2.bf16.xpose.msra.mxu0 0
    %2150 = vmatprep.subr.bf16.mxu0 0
    %2151 = vmatpush2.bf16.xpose.msra.mxu0 0
    %2152 = vmatprep.subr.bf16.mxu0 0
    %2153 = vmatpush2.bf16.xpose.msra.mxu0 0
    %2154 = vmatprep.subr.bf16.mxu0 0
    %2155 = vmatpush2.bf16.xpose.msra.mxu0 0
    %2156 = vmatprep.subr.bf16.mxu0 0
    %2157 = vmatpush2.bf16.xpose.msra.mxu0 0
    %2158 = vmatprep.subr.bf16.mxu0 0
    %2159 = vmatpush2.bf16.xpose.msra.mxu0 0
    %2160 = vmatprep.subr.bf16.mxu0 0
    %2161 = vmatpush2.bf16.xpose.msra.mxu0 0
    %2162 = vmatprep.subr.bf16.mxu0 0
    %2163 = vmatpush2.bf16.xpose.msra.mxu0 0
    %2164 = vmatprep.mubr.bf16.mxu0 %v1543
    %2165 = vmatmul.mubr.bf16.gmra.mxu0 %v1542
    %v2166 = vpop.f32.mrf.mxu0
    %v2167 = vadd.f32 %v2127, %v2166
    %v2168 = vpop.f32.mrf.mxu0
    %v2169 = vpop.f32.mrf.mxu0
    %v2170 = vpop.f32.mrf.mxu0
    %2171 = vdwg.mxu0
    %2172 = vmatprep.subr.bf16.mxu0 0
    %2173 = vmatpush1.bf16.xpose.msra.mxu0 0
    %2174 = vmatprep.subr.bf16.mxu0 0
    %2175 = vmatpush1.bf16.xpose.msra.mxu0 0
    %2176 = vmatprep.subr.bf16.mxu0 0
    %2177 = vmatpush1.bf16.xpose.msra.mxu0 0
    %2178 = vmatprep.subr.bf16.mxu0 0
    %2179 = vmatpush1.bf16.xpose.msra.mxu0 0
    %2180 = vmatprep.subr.bf16.mxu0 0
    %2181 = vmatpush1.bf16.xpose.msra.mxu0 0
    %2182 = vmatprep.subr.bf16.mxu0 0
    %2183 = vmatpush1.bf16.xpose.msra.mxu0 0
    %2184 = vmatprep.subr.bf16.mxu0 %v1887
    %2185 = vmatpush1.bf16.xpose.msra.mxu0 %v1886
    %2186 = vmatprep.subr.bf16.mxu0 %v1855
    %2187 = vmatpush1.bf16.xpose.msra.mxu0 %v1854
    %2188 = vmatprep.subr.bf16.mxu0 0
    %2189 = vmatpush2.bf16.xpose.msra.mxu0 0
    %2190 = vmatprep.subr.bf16.mxu0 0
    %2191 = vmatpush2.bf16.xpose.msra.mxu0 0
    %2192 = vmatprep.subr.bf16.mxu0 0
    %2193 = vmatpush2.bf16.xpose.msra.mxu0 0
    %2194 = vmatprep.subr.bf16.mxu0 0
    %2195 = vmatpush2.bf16.xpose.msra.mxu0 0
    %2196 = vmatprep.subr.bf16.mxu0 0
    %2197 = vmatpush2.bf16.xpose.msra.mxu0 0
    %2198 = vmatprep.subr.bf16.mxu0 0
    %2199 = vmatpush2.bf16.xpose.msra.mxu0 0
    %2200 = vmatprep.subr.bf16.mxu0 0
    %2201 = vmatpush2.bf16.xpose.msra.mxu0 0
    %2202 = vmatprep.subr.bf16.mxu0 0
    %2203 = vmatpush2.bf16.xpose.msra.mxu0 0
    %2204 = vmatprep.mubr.bf16.mxu0 %v1547
    %2205 = vmatmul.mubr.bf16.gmra.mxu0 %v1546
    %v2206 = vpop.f32.mrf.mxu0
    %v2207 = vadd.f32 %v2167, %v2206
    %v2208 = vpop.f32.mrf.mxu0
    %v2209 = vpop.f32.mrf.mxu0
    %v2210 = vpop.f32.mrf.mxu0
    %2211 = vdwg.mxu0
    %2212 = vmatprep.subr.bf16.mxu0 0
    %2213 = vmatpush1.bf16.xpose.msra.mxu0 0
    %2214 = vmatprep.subr.bf16.mxu0 0
    %2215 = vmatpush1.bf16.xpose.msra.mxu0 0
    %2216 = vmatprep.subr.bf16.mxu0 0
    %2217 = vmatpush1.bf16.xpose.msra.mxu0 0
    %2218 = vmatprep.subr.bf16.mxu0 0
    %2219 = vmatpush1.bf16.xpose.msra.mxu0 0
    %2220 = vmatprep.subr.bf16.mxu0 0
    %2221 = vmatpush1.bf16.xpose.msra.mxu0 0
    %2222 = vmatprep.subr.bf16.mxu0 0
    %2223 = vmatpush1.bf16.xpose.msra.mxu0 0
    %2224 = vmatprep.subr.bf16.mxu0 %v1889
    %2225 = vmatpush1.bf16.xpose.msra.mxu0 %v1888
    %2226 = vmatprep.subr.bf16.mxu0 %v1857
    %2227 = vmatpush1.bf16.xpose.msra.mxu0 %v1856
    %2228 = vmatprep.subr.bf16.mxu0 0
    %2229 = vmatpush2.bf16.xpose.msra.mxu0 0
    %2230 = vmatprep.subr.bf16.mxu0 0
    %2231 = vmatpush2.bf16.xpose.msra.mxu0 0
    %2232 = vmatprep.subr.bf16.mxu0 0
    %2233 = vmatpush2.bf16.xpose.msra.mxu0 0
    %2234 = vmatprep.subr.bf16.mxu0 0
    %2235 = vmatpush2.bf16.xpose.msra.mxu0 0
    %2236 = vmatprep.subr.bf16.mxu0 0
    %2237 = vmatpush2.bf16.xpose.msra.mxu0 0
    %2238 = vmatprep.subr.bf16.mxu0 0
    %2239 = vmatpush2.bf16.xpose.msra.mxu0 0
    %2240 = vmatprep.subr.bf16.mxu0 0
    %2241 = vmatpush2.bf16.xpose.msra.mxu0 0
    %2242 = vmatprep.subr.bf16.mxu0 0
    %2243 = vmatpush2.bf16.xpose.msra.mxu0 0
    %2244 = vmatprep.mubr.bf16.mxu0 %v1551
    %2245 = vmatmul.mubr.bf16.gmra.mxu0 %v1550
    %v2246 = vpop.f32.mrf.mxu0
    %v2247 = vadd.f32 %v2207, %v2246
    %v2248 = vpop.f32.mrf.mxu0
    %v2249 = vpop.f32.mrf.mxu0
    %v2250 = vpop.f32.mrf.mxu0
    %2251 = vdwg.mxu0
    %2252 = vmatprep.subr.bf16.mxu0 0
    %2253 = vmatpush1.bf16.xpose.msra.mxu0 0
    %2254 = vmatprep.subr.bf16.mxu0 0
    %2255 = vmatpush1.bf16.xpose.msra.mxu0 0
    %2256 = vmatprep.subr.bf16.mxu0 0
    %2257 = vmatpush1.bf16.xpose.msra.mxu0 0
    %2258 = vmatprep.subr.bf16.mxu0 0
    %2259 = vmatpush1.bf16.xpose.msra.mxu0 0
    %2260 = vmatprep.subr.bf16.mxu0 0
    %2261 = vmatpush1.bf16.xpose.msra.mxu0 0
    %2262 = vmatprep.subr.bf16.mxu0 0
    %2263 = vmatpush1.bf16.xpose.msra.mxu0 0
    %2264 = vmatprep.subr.bf16.mxu0 %v1891
    %2265 = vmatpush1.bf16.xpose.msra.mxu0 %v1890
    %2266 = vmatprep.subr.bf16.mxu0 %v1859
    %2267 = vmatpush1.bf16.xpose.msra.mxu0 %v1858
    %2268 = vmatprep.subr.bf16.mxu0 0
    %2269 = vmatpush2.bf16.xpose.msra.mxu0 0
    %2270 = vmatprep.subr.bf16.mxu0 0
    %2271 = vmatpush2.bf16.xpose.msra.mxu0 0
    %2272 = vmatprep.subr.bf16.mxu0 0
    %2273 = vmatpush2.bf16.xpose.msra.mxu0 0
    %2274 = vmatprep.subr.bf16.mxu0 0
    %2275 = vmatpush2.bf16.xpose.msra.mxu0 0
    %2276 = vmatprep.subr.bf16.mxu0 0
    %2277 = vmatpush2.bf16.xpose.msra.mxu0 0
    %2278 = vmatprep.subr.bf16.mxu0 0
    %2279 = vmatpush2.bf16.xpose.msra.mxu0 0
    %2280 = vmatprep.subr.bf16.mxu0 0
    %2281 = vmatpush2.bf16.xpose.msra.mxu0 0
    %2282 = vmatprep.subr.bf16.mxu0 0
    %2283 = vmatpush2.bf16.xpose.msra.mxu0 0
    %2284 = vmatprep.mubr.bf16.mxu0 %v1555
    %2285 = vmatmul.mubr.bf16.gmra.mxu0 %v1554
    %v2286 = vpop.f32.mrf.mxu0
    %v2287 = vadd.f32 %v2247, %v2286
    %v2288 = vpop.f32.mrf.mxu0
    %v2289 = vpop.f32.mrf.mxu0
    %v2290 = vpop.f32.mrf.mxu0
    %2291 = vdwg.mxu0
    %2292 = vmatprep.subr.bf16.mxu0 0
    %2293 = vmatpush1.bf16.xpose.msra.mxu0 0
    %2294 = vmatprep.subr.bf16.mxu0 0
    %2295 = vmatpush1.bf16.xpose.msra.mxu0 0
    %2296 = vmatprep.subr.bf16.mxu0 0
    %2297 = vmatpush1.bf16.xpose.msra.mxu0 0
    %2298 = vmatprep.subr.bf16.mxu0 0
    %2299 = vmatpush1.bf16.xpose.msra.mxu0 0
    %2300 = vmatprep.subr.bf16.mxu0 0
    %2301 = vmatpush1.bf16.xpose.msra.mxu0 0
    %2302 = vmatprep.subr.bf16.mxu0 0
    %2303 = vmatpush1.bf16.xpose.msra.mxu0 0
    %2304 = vmatprep.subr.bf16.mxu0 %v1893
    %2305 = vmatpush1.bf16.xpose.msra.mxu0 %v1892
    %2306 = vmatprep.subr.bf16.mxu0 %v1861
    %2307 = vmatpush1.bf16.xpose.msra.mxu0 %v1860
    %2308 = vmatprep.subr.bf16.mxu0 0
    %2309 = vmatpush2.bf16.xpose.msra.mxu0 0
    %2310 = vmatprep.subr.bf16.mxu0 0
    %2311 = vmatpush2.bf16.xpose.msra.mxu0 0
    %2312 = vmatprep.subr.bf16.mxu0 0
    %2313 = vmatpush2.bf16.xpose.msra.mxu0 0
    %2314 = vmatprep.subr.bf16.mxu0 0
    %2315 = vmatpush2.bf16.xpose.msra.mxu0 0
    %2316 = vmatprep.subr.bf16.mxu0 0
    %2317 = vmatpush2.bf16.xpose.msra.mxu0 0
    %2318 = vmatprep.subr.bf16.mxu0 0
    %2319 = vmatpush2.bf16.xpose.msra.mxu0 0
    %2320 = vmatprep.subr.bf16.mxu0 0
    %2321 = vmatpush2.bf16.xpose.msra.mxu0 0
    %2322 = vmatprep.subr.bf16.mxu0 0
    %2323 = vmatpush2.bf16.xpose.msra.mxu0 0
    %2324 = vmatprep.mubr.bf16.mxu0 %v1527
    %2325 = vmatmul.mubr.bf16.gmra.mxu0 %v1526
    %v2326 = vpop.f32.mrf.mxu0
    %v2327 = vadd.f32 %v2287, %v2326
    %v2328 = vpop.f32.mrf.mxu0
    %v2329 = vpop.f32.mrf.mxu0
    %v2330 = vpop.f32.mrf.mxu0
    %2331 = vdwg.mxu0
    %2332 = vmatprep.subr.bf16.mxu0 0
    %2333 = vmatpush1.bf16.xpose.msra.mxu0 0
    %2334 = vmatprep.subr.bf16.mxu0 0
    %2335 = vmatpush1.bf16.xpose.msra.mxu0 0
    %2336 = vmatprep.subr.bf16.mxu0 0
    %2337 = vmatpush1.bf16.xpose.msra.mxu0 0
    %2338 = vmatprep.subr.bf16.mxu0 0
    %2339 = vmatpush1.bf16.xpose.msra.mxu0 0
    %2340 = vmatprep.subr.bf16.mxu0 0
    %2341 = vmatpush1.bf16.xpose.msra.mxu0 0
    %2342 = vmatprep.subr.bf16.mxu0 0
    %2343 = vmatpush1.bf16.xpose.msra.mxu0 0
    %2344 = vmatprep.subr.bf16.mxu0 %v1895
    %2345 = vmatpush1.bf16.xpose.msra.mxu0 %v1894
    %2346 = vmatprep.subr.bf16.mxu0 %v1863
    %2347 = vmatpush1.bf16.xpose.msra.mxu0 %v1862
    %2348 = vmatprep.subr.bf16.mxu0 0
    %2349 = vmatpush2.bf16.xpose.msra.mxu0 0
    %2350 = vmatprep.subr.bf16.mxu0 0
    %2351 = vmatpush2.bf16.xpose.msra.mxu0 0
    %2352 = vmatprep.subr.bf16.mxu0 0
    %2353 = vmatpush2.bf16.xpose.msra.mxu0 0
    %2354 = vmatprep.subr.bf16.mxu0 0
    %2355 = vmatpush2.bf16.xpose.msra.mxu0 0
    %2356 = vmatprep.subr.bf16.mxu0 0
    %2357 = vmatpush2.bf16.xpose.msra.mxu0 0
    %2358 = vmatprep.subr.bf16.mxu0 0
    %2359 = vmatpush2.bf16.xpose.msra.mxu0 0
    %2360 = vmatprep.subr.bf16.mxu0 0
    %2361 = vmatpush2.bf16.xpose.msra.mxu0 0
    %2362 = vmatprep.subr.bf16.mxu0 0
    %2363 = vmatpush2.bf16.xpose.msra.mxu0 0
    %2364 = vmatprep.mubr.bf16.mxu0 %v1561
    %2365 = vmatmul.mubr.bf16.gmra.mxu0 %v1560
    %v2366 = vpop.f32.mrf.mxu0
    %v2367 = vadd.f32 %v2327, %v2366
    %v2368 = vpop.f32.mrf.mxu0
    %v2369 = vpop.f32.mrf.mxu0
    %v2370 = vpop.f32.mrf.mxu0
    %2371 = vdwg.mxu0
    %2372 = vmatprep.subr.bf16.mxu0 0
    %2373 = vmatpush1.bf16.xpose.msra.mxu0 0
    %2374 = vmatprep.subr.bf16.mxu0 0
    %2375 = vmatpush1.bf16.xpose.msra.mxu0 0
    %2376 = vmatprep.subr.bf16.mxu0 0
    %2377 = vmatpush1.bf16.xpose.msra.mxu0 0
    %2378 = vmatprep.subr.bf16.mxu0 0
    %2379 = vmatpush1.bf16.xpose.msra.mxu0 0
    %2380 = vmatprep.subr.bf16.mxu0 0
    %2381 = vmatpush1.bf16.xpose.msra.mxu0 0
    %2382 = vmatprep.subr.bf16.mxu0 0
    %2383 = vmatpush1.bf16.xpose.msra.mxu0 0
    %2384 = vmatprep.subr.bf16.mxu0 %v1897
    %2385 = vmatpush1.bf16.xpose.msra.mxu0 %v1896
    %2386 = vmatprep.subr.bf16.mxu0 %v1865
    %2387 = vmatpush1.bf16.xpose.msra.mxu0 %v1864
    %2388 = vmatprep.subr.bf16.mxu0 0
    %2389 = vmatpush2.bf16.xpose.msra.mxu0 0
    %2390 = vmatprep.subr.bf16.mxu0 0
    %2391 = vmatpush2.bf16.xpose.msra.mxu0 0
    %2392 = vmatprep.subr.bf16.mxu0 0
    %2393 = vmatpush2.bf16.xpose.msra.mxu0 0
    %2394 = vmatprep.subr.bf16.mxu0 0
    %2395 = vmatpush2.bf16.xpose.msra.mxu0 0
    %2396 = vmatprep.subr.bf16.mxu0 0
    %2397 = vmatpush2.bf16.xpose.msra.mxu0 0
    %2398 = vmatprep.subr.bf16.mxu0 0
    %2399 = vmatpush2.bf16.xpose.msra.mxu0 0
    %2400 = vmatprep.subr.bf16.mxu0 0
    %2401 = vmatpush2.bf16.xpose.msra.mxu0 0
    %2402 = vmatprep.subr.bf16.mxu0 0
    %2403 = vmatpush2.bf16.xpose.msra.mxu0 0
    %2404 = vmatprep.mubr.bf16.mxu0 %v1565
    %2405 = vmatmul.mubr.bf16.gmra.mxu0 %v1564
    %v2406 = vpop.f32.mrf.mxu0
    %v2407 = vadd.f32 %v2367, %v2406
    %v2408 = vpop.f32.mrf.mxu0
    %v2409 = vpop.f32.mrf.mxu0
    %v2410 = vpop.f32.mrf.mxu0
    %2411 = vdwg.mxu0
    %2412 = vmatprep.subr.bf16.mxu0 0
    %2413 = vmatpush1.bf16.xpose.msra.mxu0 0
    %2414 = vmatprep.subr.bf16.mxu0 0
    %2415 = vmatpush1.bf16.xpose.msra.mxu0 0
    %2416 = vmatprep.subr.bf16.mxu0 0
    %2417 = vmatpush1.bf16.xpose.msra.mxu0 0
    %2418 = vmatprep.subr.bf16.mxu0 0
    %2419 = vmatpush1.bf16.xpose.msra.mxu0 0
    %2420 = vmatprep.subr.bf16.mxu0 0
    %2421 = vmatpush1.bf16.xpose.msra.mxu0 0
    %2422 = vmatprep.subr.bf16.mxu0 0
    %2423 = vmatpush1.bf16.xpose.msra.mxu0 0
    %2424 = vmatprep.subr.bf16.mxu0 %v1899
    %2425 = vmatpush1.bf16.xpose.msra.mxu0 %v1898
    %2426 = vmatprep.subr.bf16.mxu0 %v1867
    %2427 = vmatpush1.bf16.xpose.msra.mxu0 %v1866
    %2428 = vmatprep.subr.bf16.mxu0 0
    %2429 = vmatpush2.bf16.xpose.msra.mxu0 0
    %2430 = vmatprep.subr.bf16.mxu0 0
    %2431 = vmatpush2.bf16.xpose.msra.mxu0 0
    %2432 = vmatprep.subr.bf16.mxu0 0
    %2433 = vmatpush2.bf16.xpose.msra.mxu0 0
    %2434 = vmatprep.subr.bf16.mxu0 0
    %2435 = vmatpush2.bf16.xpose.msra.mxu0 0
    %2436 = vmatprep.subr.bf16.mxu0 0
    %2437 = vmatpush2.bf16.xpose.msra.mxu0 0
    %2438 = vmatprep.subr.bf16.mxu0 0
    %2439 = vmatpush2.bf16.xpose.msra.mxu0 0
    %2440 = vmatprep.subr.bf16.mxu0 0
    %2441 = vmatpush2.bf16.xpose.msra.mxu0 0
    %2442 = vmatprep.subr.bf16.mxu0 0
    %2443 = vmatpush2.bf16.xpose.msra.mxu0 0
    %2444 = vmatprep.mubr.bf16.mxu0 %v1569
    %2445 = vmatmul.mubr.bf16.gmra.mxu0 %v1568
    %v2446 = vpop.f32.mrf.mxu0
    %v2447 = vadd.f32 %v2407, %v2446
    %v2448 = vpop.f32.mrf.mxu0
    %v2449 = vpop.f32.mrf.mxu0
    %v2450 = vpop.f32.mrf.mxu0
    %2451 = vdwg.mxu0
    %2452 = vmatprep.subr.bf16.mxu0 0
    %2453 = vmatpush1.bf16.xpose.msra.mxu0 0
    %2454 = vmatprep.subr.bf16.mxu0 0
    %2455 = vmatpush1.bf16.xpose.msra.mxu0 0
    %2456 = vmatprep.subr.bf16.mxu0 0
    %2457 = vmatpush1.bf16.xpose.msra.mxu0 0
    %2458 = vmatprep.subr.bf16.mxu0 0
    %2459 = vmatpush1.bf16.xpose.msra.mxu0 0
    %2460 = vmatprep.subr.bf16.mxu0 0
    %2461 = vmatpush1.bf16.xpose.msra.mxu0 0
    %2462 = vmatprep.subr.bf16.mxu0 0
    %2463 = vmatpush1.bf16.xpose.msra.mxu0 0
    %2464 = vmatprep.subr.bf16.mxu0 %v1901
    %2465 = vmatpush1.bf16.xpose.msra.mxu0 %v1900
    %2466 = vmatprep.subr.bf16.mxu0 %v1869
    %2467 = vmatpush1.bf16.xpose.msra.mxu0 %v1868
    %2468 = vmatprep.subr.bf16.mxu0 0
    %2469 = vmatpush2.bf16.xpose.msra.mxu0 0
    %2470 = vmatprep.subr.bf16.mxu0 0
    %2471 = vmatpush2.bf16.xpose.msra.mxu0 0
    %2472 = vmatprep.subr.bf16.mxu0 0
    %2473 = vmatpush2.bf16.xpose.msra.mxu0 0
    %2474 = vmatprep.subr.bf16.mxu0 0
    %2475 = vmatpush2.bf16.xpose.msra.mxu0 0
    %2476 = vmatprep.subr.bf16.mxu0 0
    %2477 = vmatpush2.bf16.xpose.msra.mxu0 0
    %2478 = vmatprep.subr.bf16.mxu0 0
    %2479 = vmatpush2.bf16.xpose.msra.mxu0 0
    %2480 = vmatprep.subr.bf16.mxu0 0
    %2481 = vmatpush2.bf16.xpose.msra.mxu0 0
    %2482 = vmatprep.subr.bf16.mxu0 0
    %2483 = vmatpush2.bf16.xpose.msra.mxu0 0
    %2484 = vmatprep.mubr.bf16.mxu0 %v1573
    %2485 = vmatmul.mubr.bf16.gmra.mxu0 %v1572
    %v2486 = vpop.f32.mrf.mxu0
    %v2487 = vadd.f32 %v2447, %v2486
    %v2488 = vpop.f32.mrf.mxu0
    %v2489 = vpop.f32.mrf.mxu0
    %v2490 = vpop.f32.mrf.mxu0
    %2491 = vdwg.mxu0
    %2492 = vmatprep.subr.bf16.mxu0 0
    %2493 = vmatpush1.bf16.xpose.msra.mxu0 0
    %2494 = vmatprep.subr.bf16.mxu0 0
    %2495 = vmatpush1.bf16.xpose.msra.mxu0 0
    %2496 = vmatprep.subr.bf16.mxu0 0
    %2497 = vmatpush1.bf16.xpose.msra.mxu0 0
    %2498 = vmatprep.subr.bf16.mxu0 0
    %2499 = vmatpush1.bf16.xpose.msra.mxu0 0
    %2500 = vmatprep.subr.bf16.mxu0 0
    %2501 = vmatpush1.bf16.xpose.msra.mxu0 0
    %2502 = vmatprep.subr.bf16.mxu0 0
    %2503 = vmatpush1.bf16.xpose.msra.mxu0 0
    %2504 = vmatprep.subr.bf16.mxu0 %v1903
    %2505 = vmatpush1.bf16.xpose.msra.mxu0 %v1902
    %2506 = vmatprep.subr.bf16.mxu0 %v1871
    %2507 = vmatpush1.bf16.xpose.msra.mxu0 %v1870
    %2508 = vmatprep.subr.bf16.mxu0 0
    %2509 = vmatpush2.bf16.xpose.msra.mxu0 0
    %2510 = vmatprep.subr.bf16.mxu0 0
    %2511 = vmatpush2.bf16.xpose.msra.mxu0 0
    %2512 = vmatprep.subr.bf16.mxu0 0
    %2513 = vmatpush2.bf16.xpose.msra.mxu0 0
    %2514 = vmatprep.subr.bf16.mxu0 0
    %2515 = vmatpush2.bf16.xpose.msra.mxu0 0
    %2516 = vmatprep.subr.bf16.mxu0 0
    %2517 = vmatpush2.bf16.xpose.msra.mxu0 0
    %2518 = vmatprep.subr.bf16.mxu0 0
    %2519 = vmatpush2.bf16.xpose.msra.mxu0 0
    %2520 = vmatprep.subr.bf16.mxu0 0
    %2521 = vmatpush2.bf16.xpose.msra.mxu0 0
    %2522 = vmatprep.subr.bf16.mxu0 0
    %2523 = vmatpush2.bf16.xpose.msra.mxu0 0
    %2524 = vmatprep.mubr.bf16.mxu0 %v1577
    %2525 = vmatmul.mubr.bf16.gmra.mxu0 %v1576
    %v2526 = vpop.f32.mrf.mxu0
    %v2527 = vadd.f32 %v2487, %v2526
    %v2528 = vpop.f32.mrf.mxu0
    %v2529 = vpop.f32.mrf.mxu0
    %v2530 = vpop.f32.mrf.mxu0
    %2531 = vdwg.mxu0
    %2532 = vmatprep.subr.bf16.mxu0 0
    %2533 = vmatpush1.bf16.xpose.msra.mxu0 0
    %2534 = vmatprep.subr.bf16.mxu0 0
    %2535 = vmatpush1.bf16.xpose.msra.mxu0 0
    %2536 = vmatprep.subr.bf16.mxu0 0
    %2537 = vmatpush1.bf16.xpose.msra.mxu0 0
    %2538 = vmatprep.subr.bf16.mxu0 0
    %2539 = vmatpush1.bf16.xpose.msra.mxu0 0
    %2540 = vmatprep.subr.bf16.mxu0 0
    %2541 = vmatpush1.bf16.xpose.msra.mxu0 0
    %2542 = vmatprep.subr.bf16.mxu0 0
    %2543 = vmatpush1.bf16.xpose.msra.mxu0 0
    %2544 = vmatprep.subr.bf16.mxu0 %v1905
    %2545 = vmatpush1.bf16.xpose.msra.mxu0 %v1904
    %2546 = vmatprep.subr.bf16.mxu0 %v1873
    %2547 = vmatpush1.bf16.xpose.msra.mxu0 %v1872
    %2548 = vmatprep.subr.bf16.mxu0 0
    %2549 = vmatpush2.bf16.xpose.msra.mxu0 0
    %2550 = vmatprep.subr.bf16.mxu0 0
    %2551 = vmatpush2.bf16.xpose.msra.mxu0 0
    %2552 = vmatprep.subr.bf16.mxu0 0
    %2553 = vmatpush2.bf16.xpose.msra.mxu0 0
    %2554 = vmatprep.subr.bf16.mxu0 0
    %2555 = vmatpush2.bf16.xpose.msra.mxu0 0
    %2556 = vmatprep.subr.bf16.mxu0 0
    %2557 = vmatpush2.bf16.xpose.msra.mxu0 0
    %2558 = vmatprep.subr.bf16.mxu0 0
    %2559 = vmatpush2.bf16.xpose.msra.mxu0 0
    %2560 = vmatprep.subr.bf16.mxu0 0
    %2561 = vmatpush2.bf16.xpose.msra.mxu0 0
    %2562 = vmatprep.subr.bf16.mxu0 0
    %2563 = vmatpush2.bf16.xpose.msra.mxu0 0
    %2564 = vmatprep.mubr.bf16.mxu0 %v1581
    %2565 = vmatmul.mubr.bf16.gmra.mxu0 %v1580
    %v2566 = vpop.f32.mrf.mxu0
    %v2567 = vadd.f32 %v2527, %v2566
    %v2568 = vpop.f32.mrf.mxu0
    %v2569 = vpop.f32.mrf.mxu0
    %v2570 = vpop.f32.mrf.mxu0
    %2571 = vdwg.mxu0
    %2572 = vmatprep.subr.bf16.mxu0 0
    %2573 = vmatpush1.bf16.xpose.msra.mxu0 0
    %2574 = vmatprep.subr.bf16.mxu0 0
    %2575 = vmatpush1.bf16.xpose.msra.mxu0 0
    %2576 = vmatprep.subr.bf16.mxu0 0
    %2577 = vmatpush1.bf16.xpose.msra.mxu0 0
    %2578 = vmatprep.subr.bf16.mxu0 0
    %2579 = vmatpush1.bf16.xpose.msra.mxu0 0
    %2580 = vmatprep.subr.bf16.mxu0 0
    %2581 = vmatpush1.bf16.xpose.msra.mxu0 0
    %2582 = vmatprep.subr.bf16.mxu0 0
    %2583 = vmatpush1.bf16.xpose.msra.mxu0 0
    %2584 = vmatprep.subr.bf16.mxu0 %v1907
    %2585 = vmatpush1.bf16.xpose.msra.mxu0 %v1906
    %2586 = vmatprep.subr.bf16.mxu0 %v1875
    %2587 = vmatpush1.bf16.xpose.msra.mxu0 %v1874
    %2588 = vmatprep.subr.bf16.mxu0 0
    %2589 = vmatpush2.bf16.xpose.msra.mxu0 0
    %2590 = vmatprep.subr.bf16.mxu0 0
    %2591 = vmatpush2.bf16.xpose.msra.mxu0 0
    %2592 = vmatprep.subr.bf16.mxu0 0
    %2593 = vmatpush2.bf16.xpose.msra.mxu0 0
    %2594 = vmatprep.subr.bf16.mxu0 0
    %2595 = vmatpush2.bf16.xpose.msra.mxu0 0
    %2596 = vmatprep.subr.bf16.mxu0 0
    %2597 = vmatpush2.bf16.xpose.msra.mxu0 0
    %2598 = vmatprep.subr.bf16.mxu0 0
    %2599 = vmatpush2.bf16.xpose.msra.mxu0 0
    %2600 = vmatprep.subr.bf16.mxu0 0
    %2601 = vmatpush2.bf16.xpose.msra.mxu0 0
    %2602 = vmatprep.subr.bf16.mxu0 0
    %2603 = vmatpush2.bf16.xpose.msra.mxu0 0
    %2604 = vmatprep.mubr.bf16.mxu0 %v1585
    %2605 = vmatmul.mubr.bf16.gmra.mxu0 %v1584
    %v2606 = vpop.f32.mrf.mxu0
    %v2607 = vadd.f32 %v2567, %v2606
    %v2608 = vpop.f32.mrf.mxu0
    %v2609 = vpop.f32.mrf.mxu0
    %v2610 = vpop.f32.mrf.mxu0
    %2611 = vdwg.mxu0
    %v2612 = vstv %s97
    %v2613 = vmul.f32 %v1498, %v2612
    %v2614 = vmul.f32 %v2607, %v2613
    %v2615 = vld [vmem:[%s5] sm:$0x1]
    %v2617 = vlaneseq
    %v2618 = vshrl.u32 %v2617, 7
    %v2619 = vsub.s32 0, %v2618
    %v2620 = vrot.slane %v2615, %v2619
    %v2622 = vadd.f32 %v2614, %v2620
    %vm2623 = vcmask 254976
    %2624 = vst.msk [vmem:[#allocation12] sm:$0x3] %vm2623, %v2622
    // Predicated region
    $region50: #{tpu_custom_call.1} parent=1 // pred_check
      _
    $region51: #{tpu_custom_call.1} parent=1 // pred_check_branch
      %2626 = sbr.rel (0) target = $region53
    $region52: #{tpu_custom_call.1} parent=1 // pred_region
      %s2628 = ssub.s32 32, 32
      %2629 = vsyncadd [#allocation4], %s2628
      %s2631 = sshll.u32 [#allocation12], 4
      %s2632 = int_to_ptr.vmem [resolvable:$true] %s2631
      %2634 = dma.vmem_to_hbm [thread:$0]  %s2632, 32, %s7, [#allocation4]
    $region53: #{tpu_custom_call.1} parent=1 // pred_fallthru
      _
    // Predicated region
    $region54: #{tpu_custom_call.1} parent=1 // pred_check
      _
    $region55: #{tpu_custom_call.1} parent=1 // pred_check_branch
      %2636 = sbr.rel (0) target = $region57
    $region56: #{tpu_custom_call.1} parent=1 // pred_region
      %2637 = dma.done [#allocation4], 32
    $region57: #{tpu_custom_call.1} parent=1 // pred_fallthru
      _
    %2638 = vsyncpa [#allocation3], 1
    %2639 = vsyncpa [#allocation7], 1
    %2640 = vsyncpa [#allocation10], 1
    %2641 = vsyncpa [#allocation4], 1
    %2642 = vsyncpa [#allocation5], 1

</llo_original>
